<compile_context>
chip_gen: v7x
topology: tpu7x:2x2x1
jax: 0.10.0
libtpu: 0.0.40
codegen_flags: <defaults>
</compile_context>

<pallas_src>
import jax
import jax.numpy as jnp
from jax import lax
from jax.experimental import pallas as pl
from jax.experimental.pallas import tpu as pltpu


def encoder_kernel(xw_ref, xk_ref,
                   w_gi_ref, b_gi_ref,
                   whh_ref, bhh_ref,
                   wlin_ref, blin_ref,
                   out_ref, hid_ref,
                   gi_ref, fwd_ref, bwd_ref):
    S, B, E = xw_ref.shape
    H = out_ref.shape[2]
    H2 = 2 * H
    H3 = 3 * H

    # ---- fused embedding projection + input-side GRU gates (both dirs) ----
    # TODO(synk): TransformerEmbedding_bilinear is not defined in the reference
    # source; approximated as emb = (emb_mat[src] * emb_mat[king]) @ Wp + bp.
    # Wp and both W_ih matrices are algebraically fused into w_gi / b_gi in the
    # wrapper, so gi == emb @ W_ih^T + b_ih exactly (dropout p=0.0 is identity).
    mixed = (xw_ref[...] * xk_ref[...][None, :, :]).reshape(S * B, E)
    gi = jnp.dot(mixed, w_gi_ref[...],
                 preferred_element_type=jnp.float32) + b_gi_ref[...]
    gi_ref[...] = gi.reshape(S, B, 6 * H)   # cols [0:3H]=fwd gates, [3H:6H]=bwd

    # Loop-invariant weights/biases loaded to vregs once (hoisted).
    whh = whh_ref[...]        # (2H, 6H) block-diagonal, pre-transposed
    bhh = bhh_ref[...]        # (1, 6H)

    # ---- fused bidirectional recurrence: one matmul per step --------------
    # h2 = [h_fwd | h_bwd] of shape (B, 2H); static Python loop => fully
    # unrolled body with static ref indices.
    h2 = jnp.zeros((B, H2), dtype=jnp.float32)
    for t in range(S):
        gh = jnp.dot(h2, whh, preferred_element_type=jnp.float32) + bhh  # (B,6H)
        gf = gi_ref[t]             # (B, 6H) — forward uses cols [0:3H]
        gb = gi_ref[S - 1 - t]     # (B, 6H) — backward uses cols [3H:6H]

        h_f = h2[:, 0:H]
        h_b = h2[:, H:H2]

        # forward direction (PyTorch gate order r, z, n)
        r_f = jax.nn.sigmoid(gf[:, 0:H] + gh[:, 0:H])
        z_f = jax.nn.sigmoid(gf[:, H:H2] + gh[:, H:H2])
        n_f = jnp.tanh(gf[:, H2:H3] + r_f * gh[:, H2:H3])
        h_f_new = (1.0 - z_f) * n_f + z_f * h_f

        # backward direction
        r_b = jax.nn.sigmoid(gb[:, H3:H3 + H] + gh[:, H3:H3 + H])
        z_b = jax.nn.sigmoid(gb[:, H3 + H:H3 + H2] + gh[:, H3 + H:H3 + H2])
        n_b = jnp.tanh(gb[:, H3 + H2:] + r_b * gh[:, H3 + H2:])
        h_b_new = (1.0 - z_b) * n_b + z_b * h_b

        fwd_ref[t] = h_f_new
        bwd_ref[S - 1 - t] = h_b_new
        h2 = jnp.concatenate([h_f_new, h_b_new], axis=-1)

    # hidden[0] = forward final state, hidden[1] = backward final state
    hid_ref[0] = h2[:, 0:H]
    hid_ref[1] = h2[:, H:H2]

    # ---- outputs = tanh(Linear(concat([fwd, bwd], -1))) : single matmul ----
    cat = jnp.concatenate([fwd_ref[...], bwd_ref[...]], axis=-1)   # (S, B, 2H)
    proj = jnp.dot(cat.reshape(S * B, H2), wlin_ref[...],
                   preferred_element_type=jnp.float32) + blin_ref[...]
    out_ref[...] = jnp.tanh(proj).reshape(S, B, H)


def make_encoder_params(key, vocab, embed_size, hidden_size):
    ks = jax.random.split(key, 16)
    s = 0.1
    E, H = embed_size, hidden_size
    f32 = jnp.float32
    return dict(
        emb_mat=jax.random.normal(ks[0], (vocab, E), f32) * s,
        w_proj=jax.random.normal(ks[1], (E, H), f32) * s,
        b_proj=jax.random.normal(ks[2], (H,), f32) * s,
        # GRU forward direction (PyTorch layout: (3H, in) / (3H, H) / (3H,))
        w_ih_f=jax.random.normal(ks[3], (3 * H, H), f32) * s,
        w_hh_f=jax.random.normal(ks[4], (3 * H, H), f32) * s,
        b_ih_f=jax.random.normal(ks[5], (3 * H,), f32) * s,
        b_hh_f=jax.random.normal(ks[6], (3 * H,), f32) * s,
        # GRU backward direction
        w_ih_b=jax.random.normal(ks[7], (3 * H, H), f32) * s,
        w_hh_b=jax.random.normal(ks[8], (3 * H, H), f32) * s,
        b_ih_b=jax.random.normal(ks[9], (3 * H,), f32) * s,
        b_hh_b=jax.random.normal(ks[10], (3 * H,), f32) * s,
        # final Linear(2H -> H), PyTorch layout (out, in)
        w_lin=jax.random.normal(ks[11], (H, 2 * H), f32) * s,
        b_lin=jax.random.normal(ks[12], (H,), f32) * s,
    )


def encoder_forward(params, src, king_id):
    S, B = src.shape
    H = params["w_proj"].shape[1]

    # glue: embedding table gathers (data-dependent) stay in plain JAX
    xw = jnp.take(params["emb_mat"], src, axis=0)        # (S, B, E)
    xk = jnp.take(params["emb_mat"], king_id, axis=0)    # (B, E)

    # ---- wrapper-side weight plumbing (free layout work) -------------------
    # Fuse embedding projection into the input-side gate matmuls for BOTH
    # directions:  gi = emb @ W_ih^T + b_ih with emb = mixed @ Wp + bp
    #            = mixed @ (Wp @ W_ih^T) + (bp @ W_ih^T + b_ih)
    w_ih_cat_t = jnp.concatenate(
        [params["w_ih_f"].T, params["w_ih_b"].T], axis=1)            # (H, 6H)
    w_gi = params["w_proj"] @ w_ih_cat_t                             # (E, 6H)
    b_gi = (params["b_proj"] @ w_ih_cat_t
            + jnp.concatenate([params["b_ih_f"], params["b_ih_b"]]))  # (6H,)

    # Block-diagonal, pre-transposed hidden-state weights -> one matmul/step.
    w_hh_blk = jnp.zeros((2 * H, 6 * H), jnp.float32)
    w_hh_blk = w_hh_blk.at[0:H, 0:3 * H].set(params["w_hh_f"].T)
    w_hh_blk = w_hh_blk.at[H:2 * H, 3 * H:6 * H].set(params["w_hh_b"].T)
    b_hh_cat = jnp.concatenate([params["b_hh_f"], params["b_hh_b"]])  # (6H,)

    w_lin_t = params["w_lin"].T                                      # (2H, H)

    args = (
        xw, xk,
        w_gi, b_gi.reshape(1, 6 * H),
        w_hh_blk, b_hh_cat.reshape(1, 6 * H),
        w_lin_t, params["b_lin"].reshape(1, H),
    )

    vmem = pl.BlockSpec(memory_space=pltpu.MemorySpace.VMEM)
    outputs, hidden = pl.pallas_call(
        encoder_kernel,
        out_shape=(jax.ShapeDtypeStruct((S, B, H), jnp.float32),    # outputs
                   jax.ShapeDtypeStruct((2, B, H), jnp.float32)),   # hidden
        in_specs=[vmem] * len(args),
        out_specs=(vmem, vmem),
        scratch_shapes=[pltpu.VMEM((S, B, 6 * H), jnp.float32),  # gi (both dirs)
                        pltpu.VMEM((S, B, H), jnp.float32),      # fwd states
                        pltpu.VMEM((S, B, H), jnp.float32)],     # bwd states
    )(*args)
    # TODO(synk): on v7x the two GRU directions could be split across the two
    # TensorCores via a grid=(2,) parallel axis; kept single-core here since
    # v5e/v6e have one TC and the toy sizes are overhead-dominated.
    return outputs, hidden


if __name__ == "__main__":
    S, B = 8, 2           # seq_len, batch
    VOCAB = 20
    EMBED = 48            # embed_size
    HIDDEN = 32           # hidden_size

    key = jax.random.PRNGKey(0)
    k_params, k_src, k_king = jax.random.split(key, 3)

    params = make_encoder_params(k_params, VOCAB, EMBED, HIDDEN)
    src = jax.random.randint(k_src, (S, B), 1, VOCAB, dtype=jnp.int32)
    king_id = jax.random.randint(k_king, (B,), 1, VOCAB, dtype=jnp.int32)

    outputs, hidden = jax.jit(encoder_forward)(params, src, king_id)
    jax.block_until_ready((outputs, hidden))

    assert outputs.shape == (S, B, HIDDEN)
    assert hidden.shape == (2, B, HIDDEN)
    print("KERNEL_OK")
</pallas_src>

<mosaic_0001>
module attributes {stable_mosaic.version = 11 : i64} {
  func.func @encoder_kernel(%arg0: memref<8x2x48xf32, #tpu.memory_space<vmem>>, %arg1: memref<2x48xf32, #tpu.memory_space<vmem>>, %arg2: memref<48x192xf32, #tpu.memory_space<vmem>>, %arg3: memref<1x192xf32, #tpu.memory_space<vmem>>, %arg4: memref<64x192xf32, #tpu.memory_space<vmem>>, %arg5: memref<1x192xf32, #tpu.memory_space<vmem>>, %arg6: memref<64x32xf32, #tpu.memory_space<vmem>>, %arg7: memref<1x32xf32, #tpu.memory_space<vmem>>, %arg8: memref<8x2x32xf32, #tpu.memory_space<vmem>>, %arg9: memref<2x2x32xf32, #tpu.memory_space<vmem>>, %arg10: memref<8x2x192xf32, #tpu.memory_space<vmem>>, %arg11: memref<8x2x32xf32, #tpu.memory_space<vmem>>, %arg12: memref<8x2x32xf32, #tpu.memory_space<vmem>>) attributes {dimension_semantics = [], scalar_prefetch = 0 : i64, scratch_operands = 3 : i64, tpu.core_type = #tpu.core_type<tc>} {
    %c0 = arith.constant 0 : index
    %c0_0 = arith.constant 0 : index
    %c0_1 = arith.constant 0 : index
    %0 = vector.load %arg0[%c0, %c0_0, %c0_1] : memref<8x2x48xf32, #tpu.memory_space<vmem>>, vector<8x2x48xf32>
    %c0_2 = arith.constant 0 : index
    %c0_3 = arith.constant 0 : index
    %1 = vector.load %arg1[%c0_2, %c0_3] : memref<2x48xf32, #tpu.memory_space<vmem>>, vector<2x48xf32>
    %2 = vector.shape_cast %1 : vector<2x48xf32> to vector<1x2x48xf32>
    %3 = vector.broadcast %2 : vector<1x2x48xf32> to vector<8x2x48xf32>
    %4 = arith.mulf %0, %3 : vector<8x2x48xf32>
    %5 = vector.shape_cast %4 : vector<8x2x48xf32> to vector<16x48xf32>
    %c0_4 = arith.constant 0 : index
    %c0_5 = arith.constant 0 : index
    %6 = vector.load %arg2[%c0_4, %c0_5] : memref<48x192xf32, #tpu.memory_space<vmem>>, vector<48x192xf32>
    %cst = arith.constant dense<0.000000e+00> : vector<16x192xf32>
    %7 = tpu.matmul %5, %6, %cst {dimension_numbers = #tpu.dot_dimension_numbers<[1], [0], [0], [1], [0, 0, 1, 1], [], []>} : vector<16x48xf32>, vector<48x192xf32>, vector<16x192xf32> -> vector<16x192xf32>
    %c0_6 = arith.constant 0 : index
    %c0_7 = arith.constant 0 : index
    %8 = vector.load %arg3[%c0_6, %c0_7] : memref<1x192xf32, #tpu.memory_space<vmem>>, vector<1x192xf32>
    %9 = vector.broadcast %8 : vector<1x192xf32> to vector<16x192xf32>
    %10 = arith.addf %7, %9 : vector<16x192xf32>
    %11 = vector.shape_cast %10 : vector<16x192xf32> to vector<8x2x192xf32>
    %c0_8 = arith.constant 0 : index
    %c0_9 = arith.constant 0 : index
    %c0_10 = arith.constant 0 : index
    %12 = vector.load %arg10[%c0_8, %c0_9, %c0_10] : memref<8x2x192xf32, #tpu.memory_space<vmem>>, vector<8x2x192xf32>
    tpu.vector_store %arg10[%c0_8, %c0_9, %c0_10], %11 {strides = array<i32>} : memref<8x2x192xf32, #tpu.memory_space<vmem>>, vector<8x2x192xf32>,
    %c0_11 = arith.constant 0 : index
    %c0_12 = arith.constant 0 : index
    %13 = vector.load %arg4[%c0_11, %c0_12] : memref<64x192xf32, #tpu.memory_space<vmem>>, vector<64x192xf32>
    %c0_13 = arith.constant 0 : index
    %c0_14 = arith.constant 0 : index
    %14 = vector.load %arg5[%c0_13, %c0_14] : memref<1x192xf32, #tpu.memory_space<vmem>>, vector<1x192xf32>
    %cst_15 = arith.constant 0.000000e+00 : f32
    %15 = vector.broadcast %cst_15 : f32 to vector<2x64xf32>
    %cst_16 = arith.constant dense<0.000000e+00> : vector<2x192xf32>
    %16 = tpu.matmul %15, %13, %cst_16 {dimension_numbers = #tpu.dot_dimension_numbers<[1], [0], [0], [1], [0, 0, 1, 1], [], []>} : vector<2x64xf32>, vector<64x192xf32>, vector<2x192xf32> -> vector<2x192xf32>
    %17 = vector.broadcast %14 : vector<1x192xf32> to vector<2x192xf32>
    %18 = arith.addf %16, %17 : vector<2x192xf32>
    %c0_17 = arith.constant 0 : index
    %c0_18 = arith.constant 0 : index
    %c0_19 = arith.constant 0 : index
    %19 = vector.load %arg10[%c0_17, %c0_18, %c0_19] : memref<8x2x192xf32, #tpu.memory_space<vmem>>, vector<1x2x192xf32>
    %20 = vector.shape_cast %19 : vector<1x2x192xf32> to vector<2x192xf32>
    %c7 = arith.constant 7 : index
    %c0_20 = arith.constant 0 : index
    %c0_21 = arith.constant 0 : index
    %21 = vector.load %arg10[%c7, %c0_20, %c0_21] : memref<8x2x192xf32, #tpu.memory_space<vmem>>, vector<1x2x192xf32>
    %22 = vector.shape_cast %21 : vector<1x2x192xf32> to vector<2x192xf32>
    %23 = vector.extract_strided_slice %15 {offsets = [0, 0], sizes = [2, 32], strides = [1, 1]} : vector<2x64xf32> to vector<2x32xf32>
    %24 = vector.extract_strided_slice %15 {offsets = [0, 32], sizes = [2, 32], strides = [1, 1]} : vector<2x64xf32> to vector<2x32xf32>
    %25 = vector.extract_strided_slice %20 {offsets = [0, 0], sizes = [2, 32], strides = [1, 1]} : vector<2x192xf32> to vector<2x32xf32>
    %26 = vector.extract_strided_slice %18 {offsets = [0, 0], sizes = [2, 32], strides = [1, 1]} : vector<2x192xf32> to vector<2x32xf32>
    %27 = arith.addf %25, %26 : vector<2x32xf32>
    %28 = arith.negf %27 : vector<2x32xf32>
    %29 = math.exp %28 : vector<2x32xf32>
    %cst_22 = arith.constant 1.000000e+00 : f32
    %30 = vector.broadcast %cst_22 : f32 to vector<2x32xf32>
    %31 = arith.addf %30, %29 : vector<2x32xf32>
    %32 = arith.divf %30, %31 : vector<2x32xf32>
    %33 = vector.extract_strided_slice %20 {offsets = [0, 32], sizes = [2, 32], strides = [1, 1]} : vector<2x192xf32> to vector<2x32xf32>
    %34 = vector.extract_strided_slice %18 {offsets = [0, 32], sizes = [2, 32], strides = [1, 1]} : vector<2x192xf32> to vector<2x32xf32>
    %35 = arith.addf %33, %34 : vector<2x32xf32>
    %36 = arith.negf %35 : vector<2x32xf32>
    %37 = math.exp %36 : vector<2x32xf32>
    %cst_23 = arith.constant 1.000000e+00 : f32
    %38 = vector.broadcast %cst_23 : f32 to vector<2x32xf32>
    %39 = arith.addf %38, %37 : vector<2x32xf32>
    %40 = arith.divf %38, %39 : vector<2x32xf32>
    %41 = vector.extract_strided_slice %20 {offsets = [0, 64], sizes = [2, 32], strides = [1, 1]} : vector<2x192xf32> to vector<2x32xf32>
    %42 = vector.extract_strided_slice %18 {offsets = [0, 64], sizes = [2, 32], strides = [1, 1]} : vector<2x192xf32> to vector<2x32xf32>
    %43 = arith.mulf %32, %42 : vector<2x32xf32>
    %44 = arith.addf %41, %43 : vector<2x32xf32>
    %45 = math.tanh %44 : vector<2x32xf32>
    %cst_24 = arith.constant 1.000000e+00 : f32
    %46 = vector.broadcast %cst_24 : f32 to vector<2x32xf32>
    %47 = arith.subf %46, %40 : vector<2x32xf32>
    %48 = arith.mulf %47, %45 : vector<2x32xf32>
    %49 = arith.mulf %40, %23 : vector<2x32xf32>
    %50 = arith.addf %48, %49 : vector<2x32xf32>
    %51 = vector.extract_strided_slice %22 {offsets = [0, 96], sizes = [2, 32], strides = [1, 1]} : vector<2x192xf32> to vector<2x32xf32>
    %52 = vector.extract_strided_slice %18 {offsets = [0, 96], sizes = [2, 32], strides = [1, 1]} : vector<2x192xf32> to vector<2x32xf32>
    %53 = arith.addf %51, %52 : vector<2x32xf32>
    %54 = arith.negf %53 : vector<2x32xf32>
    %55 = math.exp %54 : vector<2x32xf32>
    %cst_25 = arith.constant 1.000000e+00 : f32
    %56 = vector.broadcast %cst_25 : f32 to vector<2x32xf32>
    %57 = arith.addf %56, %55 : vector<2x32xf32>
    %58 = arith.divf %56, %57 : vector<2x32xf32>
    %59 = vector.extract_strided_slice %22 {offsets = [0, 128], sizes = [2, 32], strides = [1, 1]} : vector<2x192xf32> to vector<2x32xf32>
    %60 = vector.extract_strided_slice %18 {offsets = [0, 128], sizes = [2, 32], strides = [1, 1]} : vector<2x192xf32> to vector<2x32xf32>
    %61 = arith.addf %59, %60 : vector<2x32xf32>
    %62 = arith.negf %61 : vector<2x32xf32>
    %63 = math.exp %62 : vector<2x32xf32>
    %cst_26 = arith.constant 1.000000e+00 : f32
    %64 = vector.broadcast %cst_26 : f32 to vector<2x32xf32>
    %65 = arith.addf %64, %63 : vector<2x32xf32>
    %66 = arith.divf %64, %65 : vector<2x32xf32>
    %67 = vector.extract_strided_slice %22 {offsets = [0, 160], sizes = [2, 32], strides = [1, 1]} : vector<2x192xf32> to vector<2x32xf32>
    %68 = vector.extract_strided_slice %18 {offsets = [0, 160], sizes = [2, 32], strides = [1, 1]} : vector<2x192xf32> to vector<2x32xf32>
    %69 = arith.mulf %58, %68 : vector<2x32xf32>
    %70 = arith.addf %67, %69 : vector<2x32xf32>
    %71 = math.tanh %70 : vector<2x32xf32>
    %cst_27 = arith.constant 1.000000e+00 : f32
    %72 = vector.broadcast %cst_27 : f32 to vector<2x32xf32>
    %73 = arith.subf %72, %66 : vector<2x32xf32>
    %74 = arith.mulf %73, %71 : vector<2x32xf32>
    %75 = arith.mulf %66, %24 : vector<2x32xf32>
    %76 = arith.addf %74, %75 : vector<2x32xf32>
    %c0_28 = arith.constant 0 : index
    %c0_29 = arith.constant 0 : index
    %c0_30 = arith.constant 0 : index
    %77 = vector.load %arg11[%c0_28, %c0_29, %c0_30] : memref<8x2x32xf32, #tpu.memory_space<vmem>>, vector<1x2x32xf32>
    %78 = vector.shape_cast %77 : vector<1x2x32xf32> to vector<2x32xf32>
    %79 = vector.shape_cast %50 : vector<2x32xf32> to vector<1x2x32xf32>
    tpu.vector_store %arg11[%c0_28, %c0_29, %c0_30], %79 {strides = array<i32>} : memref<8x2x32xf32, #tpu.memory_space<vmem>>, vector<1x2x32xf32>,
    %c7_31 = arith.constant 7 : index
    %c0_32 = arith.constant 0 : index
    %c0_33 = arith.constant 0 : index
    %80 = vector.load %arg12[%c7_31, %c0_32, %c0_33] : memref<8x2x32xf32, #tpu.memory_space<vmem>>, vector<1x2x32xf32>
    %81 = vector.shape_cast %80 : vector<1x2x32xf32> to vector<2x32xf32>
    %82 = vector.shape_cast %76 : vector<2x32xf32> to vector<1x2x32xf32>
    tpu.vector_store %arg12[%c7_31, %c0_32, %c0_33], %82 {strides = array<i32>} : memref<8x2x32xf32, #tpu.memory_space<vmem>>, vector<1x2x32xf32>,
    %83 = tpu.concatenate %50, %76 in 1 : vector<2x32xf32>, vector<2x32xf32> -> vector<2x64xf32>
    %cst_34 = arith.constant dense<0.000000e+00> : vector<2x192xf32>
    %84 = tpu.matmul %83, %13, %cst_34 {dimension_numbers = #tpu.dot_dimension_numbers<[1], [0], [0], [1], [0, 0, 1, 1], [], []>} : vector<2x64xf32>, vector<64x192xf32>, vector<2x192xf32> -> vector<2x192xf32>
    %85 = vector.broadcast %14 : vector<1x192xf32> to vector<2x192xf32>
    %86 = arith.addf %84, %85 : vector<2x192xf32>
    %c1 = arith.constant 1 : index
    %c0_35 = arith.constant 0 : index
    %c0_36 = arith.constant 0 : index
    %87 = vector.load %arg10[%c1, %c0_35, %c0_36] : memref<8x2x192xf32, #tpu.memory_space<vmem>>, vector<1x2x192xf32>
    %88 = vector.shape_cast %87 : vector<1x2x192xf32> to vector<2x192xf32>
    %c6 = arith.constant 6 : index
    %c0_37 = arith.constant 0 : index
    %c0_38 = arith.constant 0 : index
    %89 = vector.load %arg10[%c6, %c0_37, %c0_38] : memref<8x2x192xf32, #tpu.memory_space<vmem>>, vector<1x2x192xf32>
    %90 = vector.shape_cast %89 : vector<1x2x192xf32> to vector<2x192xf32>
    %91 = vector.extract_strided_slice %83 {offsets = [0, 0], sizes = [2, 32], strides = [1, 1]} : vector<2x64xf32> to vector<2x32xf32>
    %92 = vector.extract_strided_slice %83 {offsets = [0, 32], sizes = [2, 32], strides = [1, 1]} : vector<2x64xf32> to vector<2x32xf32>
    %93 = vector.extract_strided_slice %88 {offsets = [0, 0], sizes = [2, 32], strides = [1, 1]} : vector<2x192xf32> to vector<2x32xf32>
    %94 = vector.extract_strided_slice %86 {offsets = [0, 0], sizes = [2, 32], strides = [1, 1]} : vector<2x192xf32> to vector<2x32xf32>
    %95 = arith.addf %93, %94 : vector<2x32xf32>
    %96 = arith.negf %95 : vector<2x32xf32>
    %97 = math.exp %96 : vector<2x32xf32>
    %cst_39 = arith.constant 1.000000e+00 : f32
    %98 = vector.broadcast %cst_39 : f32 to vector<2x32xf32>
    %99 = arith.addf %98, %97 : vector<2x32xf32>
    %100 = arith.divf %98, %99 : vector<2x32xf32>
    %101 = vector.extract_strided_slice %88 {offsets = [0, 32], sizes = [2, 32], strides = [1, 1]} : vector<2x192xf32> to vector<2x32xf32>
    %102 = vector.extract_strided_slice %86 {offsets = [0, 32], sizes = [2, 32], strides = [1, 1]} : vector<2x192xf32> to vector<2x32xf32>
    %103 = arith.addf %101, %102 : vector<2x32xf32>
    %104 = arith.negf %103 : vector<2x32xf32>
    %105 = math.exp %104 : vector<2x32xf32>
    %cst_40 = arith.constant 1.000000e+00 : f32
    %106 = vector.broadcast %cst_40 : f32 to vector<2x32xf32>
    %107 = arith.addf %106, %105 : vector<2x32xf32>
    %108 = arith.divf %106, %107 : vector<2x32xf32>
    %109 = vector.extract_strided_slice %88 {offsets = [0, 64], sizes = [2, 32], strides = [1, 1]} : vector<2x192xf32> to vector<2x32xf32>
    %110 = vector.extract_strided_slice %86 {offsets = [0, 64], sizes = [2, 32], strides = [1, 1]} : vector<2x192xf32> to vector<2x32xf32>
    %111 = arith.mulf %100, %110 : vector<2x32xf32>
    %112 = arith.addf %109, %111 : vector<2x32xf32>
    %113 = math.tanh %112 : vector<2x32xf32>
    %cst_41 = arith.constant 1.000000e+00 : f32
    %114 = vector.broadcast %cst_41 : f32 to vector<2x32xf32>
    %115 = arith.subf %114, %108 : vector<2x32xf32>
    %116 = arith.mulf %115, %113 : vector<2x32xf32>
    %117 = arith.mulf %108, %91 : vector<2x32xf32>
    %118 = arith.addf %116, %117 : vector<2x32xf32>
    %119 = vector.extract_strided_slice %90 {offsets = [0, 96], sizes = [2, 32], strides = [1, 1]} : vector<2x192xf32> to vector<2x32xf32>
    %120 = vector.extract_strided_slice %86 {offsets = [0, 96], sizes = [2, 32], strides = [1, 1]} : vector<2x192xf32> to vector<2x32xf32>
    %121 = arith.addf %119, %120 : vector<2x32xf32>
    %122 = arith.negf %121 : vector<2x32xf32>
    %123 = math.exp %122 : vector<2x32xf32>
    %cst_42 = arith.constant 1.000000e+00 : f32
    %124 = vector.broadcast %cst_42 : f32 to vector<2x32xf32>
    %125 = arith.addf %124, %123 : vector<2x32xf32>
    %126 = arith.divf %124, %125 : vector<2x32xf32>
    %127 = vector.extract_strided_slice %90 {offsets = [0, 128], sizes = [2, 32], strides = [1, 1]} : vector<2x192xf32> to vector<2x32xf32>
    %128 = vector.extract_strided_slice %86 {offsets = [0, 128], sizes = [2, 32], strides = [1, 1]} : vector<2x192xf32> to vector<2x32xf32>
    %129 = arith.addf %127, %128 : vector<2x32xf32>
    %130 = arith.negf %129 : vector<2x32xf32>
    %131 = math.exp %130 : vector<2x32xf32>
    %cst_43 = arith.constant 1.000000e+00 : f32
    %132 = vector.broadcast %cst_43 : f32 to vector<2x32xf32>
    %133 = arith.addf %132, %131 : vector<2x32xf32>
    %134 = arith.divf %132, %133 : vector<2x32xf32>
    %135 = vector.extract_strided_slice %90 {offsets = [0, 160], sizes = [2, 32], strides = [1, 1]} : vector<2x192xf32> to vector<2x32xf32>
    %136 = vector.extract_strided_slice %86 {offsets = [0, 160], sizes = [2, 32], strides = [1, 1]} : vector<2x192xf32> to vector<2x32xf32>
    %137 = arith.mulf %126, %136 : vector<2x32xf32>
    %138 = arith.addf %135, %137 : vector<2x32xf32>
    %139 = math.tanh %138 : vector<2x32xf32>
    %cst_44 = arith.constant 1.000000e+00 : f32
    %140 = vector.broadcast %cst_44 : f32 to vector<2x32xf32>
    %141 = arith.subf %140, %134 : vector<2x32xf32>
    %142 = arith.mulf %141, %139 : vector<2x32xf32>
    %143 = arith.mulf %134, %92 : vector<2x32xf32>
    %144 = arith.addf %142, %143 : vector<2x32xf32>
    %c1_45 = arith.constant 1 : index
    %c0_46 = arith.constant 0 : index
    %c0_47 = arith.constant 0 : index
    %145 = vector.load %arg11[%c1_45, %c0_46, %c0_47] : memref<8x2x32xf32, #tpu.memory_space<vmem>>, vector<1x2x32xf32>
    %146 = vector.shape_cast %145 : vector<1x2x32xf32> to vector<2x32xf32>
    %147 = vector.shape_cast %118 : vector<2x32xf32> to vector<1x2x32xf32>
    tpu.vector_store %arg11[%c1_45, %c0_46, %c0_47], %147 {strides = array<i32>} : memref<8x2x32xf32, #tpu.memory_space<vmem>>, vector<1x2x32xf32>,
    %c6_48 = arith.constant 6 : index
    %c0_49 = arith.constant 0 : index
    %c0_50 = arith.constant 0 : index
    %148 = vector.load %arg12[%c6_48, %c0_49, %c0_50] : memref<8x2x32xf32, #tpu.memory_space<vmem>>, vector<1x2x32xf32>
    %149 = vector.shape_cast %148 : vector<1x2x32xf32> to vector<2x32xf32>
    %150 = vector.shape_cast %144 : vector<2x32xf32> to vector<1x2x32xf32>
    tpu.vector_store %arg12[%c6_48, %c0_49, %c0_50], %150 {strides = array<i32>} : memref<8x2x32xf32, #tpu.memory_space<vmem>>, vector<1x2x32xf32>,
    %151 = tpu.concatenate %118, %144 in 1 : vector<2x32xf32>, vector<2x32xf32> -> vector<2x64xf32>
    %cst_51 = arith.constant dense<0.000000e+00> : vector<2x192xf32>
    %152 = tpu.matmul %151, %13, %cst_51 {dimension_numbers = #tpu.dot_dimension_numbers<[1], [0], [0], [1], [0, 0, 1, 1], [], []>} : vector<2x64xf32>, vector<64x192xf32>, vector<2x192xf32> -> vector<2x192xf32>
    %153 = vector.broadcast %14 : vector<1x192xf32> to vector<2x192xf32>
    %154 = arith.addf %152, %153 : vector<2x192xf32>
    %c2 = arith.constant 2 : index
    %c0_52 = arith.constant 0 : index
    %c0_53 = arith.constant 0 : index
    %155 = vector.load %arg10[%c2, %c0_52, %c0_53] : memref<8x2x192xf32, #tpu.memory_space<vmem>>, vector<1x2x192xf32>
    %156 = vector.shape_cast %155 : vector<1x2x192xf32> to vector<2x192xf32>
    %c5 = arith.constant 5 : index
    %c0_54 = arith.constant 0 : index
    %c0_55 = arith.constant 0 : index
    %157 = vector.load %arg10[%c5, %c0_54, %c0_55] : memref<8x2x192xf32, #tpu.memory_space<vmem>>, vector<1x2x192xf32>
    %158 = vector.shape_cast %157 : vector<1x2x192xf32> to vector<2x192xf32>
    %159 = vector.extract_strided_slice %151 {offsets = [0, 0], sizes = [2, 32], strides = [1, 1]} : vector<2x64xf32> to vector<2x32xf32>
    %160 = vector.extract_strided_slice %151 {offsets = [0, 32], sizes = [2, 32], strides = [1, 1]} : vector<2x64xf32> to vector<2x32xf32>
    %161 = vector.extract_strided_slice %156 {offsets = [0, 0], sizes = [2, 32], strides = [1, 1]} : vector<2x192xf32> to vector<2x32xf32>
    %162 = vector.extract_strided_slice %154 {offsets = [0, 0], sizes = [2, 32], strides = [1, 1]} : vector<2x192xf32> to vector<2x32xf32>
    %163 = arith.addf %161, %162 : vector<2x32xf32>
    %164 = arith.negf %163 : vector<2x32xf32>
    %165 = math.exp %164 : vector<2x32xf32>
    %cst_56 = arith.constant 1.000000e+00 : f32
    %166 = vector.broadcast %cst_56 : f32 to vector<2x32xf32>
    %167 = arith.addf %166, %165 : vector<2x32xf32>
    %168 = arith.divf %166, %167 : vector<2x32xf32>
    %169 = vector.extract_strided_slice %156 {offsets = [0, 32], sizes = [2, 32], strides = [1, 1]} : vector<2x192xf32> to vector<2x32xf32>
    %170 = vector.extract_strided_slice %154 {offsets = [0, 32], sizes = [2, 32], strides = [1, 1]} : vector<2x192xf32> to vector<2x32xf32>
    %171 = arith.addf %169, %170 : vector<2x32xf32>
    %172 = arith.negf %171 : vector<2x32xf32>
    %173 = math.exp %172 : vector<2x32xf32>
    %cst_57 = arith.constant 1.000000e+00 : f32
    %174 = vector.broadcast %cst_57 : f32 to vector<2x32xf32>
    %175 = arith.addf %174, %173 : vector<2x32xf32>
    %176 = arith.divf %174, %175 : vector<2x32xf32>
    %177 = vector.extract_strided_slice %156 {offsets = [0, 64], sizes = [2, 32], strides = [1, 1]} : vector<2x192xf32> to vector<2x32xf32>
    %178 = vector.extract_strided_slice %154 {offsets = [0, 64], sizes = [2, 32], strides = [1, 1]} : vector<2x192xf32> to vector<2x32xf32>
    %179 = arith.mulf %168, %178 : vector<2x32xf32>
    %180 = arith.addf %177, %179 : vector<2x32xf32>
    %181 = math.tanh %180 : vector<2x32xf32>
    %cst_58 = arith.constant 1.000000e+00 : f32
    %182 = vector.broadcast %cst_58 : f32 to vector<2x32xf32>
    %183 = arith.subf %182, %176 : vector<2x32xf32>
    %184 = arith.mulf %183, %181 : vector<2x32xf32>
    %185 = arith.mulf %176, %159 : vector<2x32xf32>
    %186 = arith.addf %184, %185 : vector<2x32xf32>
    %187 = vector.extract_strided_slice %158 {offsets = [0, 96], sizes = [2, 32], strides = [1, 1]} : vector<2x192xf32> to vector<2x32xf32>
    %188 = vector.extract_strided_slice %154 {offsets = [0, 96], sizes = [2, 32], strides = [1, 1]} : vector<2x192xf32> to vector<2x32xf32>
    %189 = arith.addf %187, %188 : vector<2x32xf32>
    %190 = arith.negf %189 : vector<2x32xf32>
    %191 = math.exp %190 : vector<2x32xf32>
    %cst_59 = arith.constant 1.000000e+00 : f32
    %192 = vector.broadcast %cst_59 : f32 to vector<2x32xf32>
    %193 = arith.addf %192, %191 : vector<2x32xf32>
    %194 = arith.divf %192, %193 : vector<2x32xf32>
    %195 = vector.extract_strided_slice %158 {offsets = [0, 128], sizes = [2, 32], strides = [1, 1]} : vector<2x192xf32> to vector<2x32xf32>
    %196 = vector.extract_strided_slice %154 {offsets = [0, 128], sizes = [2, 32], strides = [1, 1]} : vector<2x192xf32> to vector<2x32xf32>
    %197 = arith.addf %195, %196 : vector<2x32xf32>
    %198 = arith.negf %197 : vector<2x32xf32>
    %199 = math.exp %198 : vector<2x32xf32>
    %cst_60 = arith.constant 1.000000e+00 : f32
    %200 = vector.broadcast %cst_60 : f32 to vector<2x32xf32>
    %201 = arith.addf %200, %199 : vector<2x32xf32>
    %202 = arith.divf %200, %201 : vector<2x32xf32>
    %203 = vector.extract_strided_slice %158 {offsets = [0, 160], sizes = [2, 32], strides = [1, 1]} : vector<2x192xf32> to vector<2x32xf32>
    %204 = vector.extract_strided_slice %154 {offsets = [0, 160], sizes = [2, 32], strides = [1, 1]} : vector<2x192xf32> to vector<2x32xf32>
    %205 = arith.mulf %194, %204 : vector<2x32xf32>
    %206 = arith.addf %203, %205 : vector<2x32xf32>
    %207 = math.tanh %206 : vector<2x32xf32>
    %cst_61 = arith.constant 1.000000e+00 : f32
    %208 = vector.broadcast %cst_61 : f32 to vector<2x32xf32>
    %209 = arith.subf %208, %202 : vector<2x32xf32>
    %210 = arith.mulf %209, %207 : vector<2x32xf32>
    %211 = arith.mulf %202, %160 : vector<2x32xf32>
    %212 = arith.addf %210, %211 : vector<2x32xf32>
    %c2_62 = arith.constant 2 : index
    %c0_63 = arith.constant 0 : index
    %c0_64 = arith.constant 0 : index
    %213 = vector.load %arg11[%c2_62, %c0_63, %c0_64] : memref<8x2x32xf32, #tpu.memory_space<vmem>>, vector<1x2x32xf32>
    %214 = vector.shape_cast %213 : vector<1x2x32xf32> to vector<2x32xf32>
    %215 = vector.shape_cast %186 : vector<2x32xf32> to vector<1x2x32xf32>
    tpu.vector_store %arg11[%c2_62, %c0_63, %c0_64], %215 {strides = array<i32>} : memref<8x2x32xf32, #tpu.memory_space<vmem>>, vector<1x2x32xf32>,
    %c5_65 = arith.constant 5 : index
    %c0_66 = arith.constant 0 : index
    %c0_67 = arith.constant 0 : index
    %216 = vector.load %arg12[%c5_65, %c0_66, %c0_67] : memref<8x2x32xf32, #tpu.memory_space<vmem>>, vector<1x2x32xf32>
    %217 = vector.shape_cast %216 : vector<1x2x32xf32> to vector<2x32xf32>
    %218 = vector.shape_cast %212 : vector<2x32xf32> to vector<1x2x32xf32>
    tpu.vector_store %arg12[%c5_65, %c0_66, %c0_67], %218 {strides = array<i32>} : memref<8x2x32xf32, #tpu.memory_space<vmem>>, vector<1x2x32xf32>,
    %219 = tpu.concatenate %186, %212 in 1 : vector<2x32xf32>, vector<2x32xf32> -> vector<2x64xf32>
    %cst_68 = arith.constant dense<0.000000e+00> : vector<2x192xf32>
    %220 = tpu.matmul %219, %13, %cst_68 {dimension_numbers = #tpu.dot_dimension_numbers<[1], [0], [0], [1], [0, 0, 1, 1], [], []>} : vector<2x64xf32>, vector<64x192xf32>, vector<2x192xf32> -> vector<2x192xf32>
    %221 = vector.broadcast %14 : vector<1x192xf32> to vector<2x192xf32>
    %222 = arith.addf %220, %221 : vector<2x192xf32>
    %c3 = arith.constant 3 : index
    %c0_69 = arith.constant 0 : index
    %c0_70 = arith.constant 0 : index
    %223 = vector.load %arg10[%c3, %c0_69, %c0_70] : memref<8x2x192xf32, #tpu.memory_space<vmem>>, vector<1x2x192xf32>
    %224 = vector.shape_cast %223 : vector<1x2x192xf32> to vector<2x192xf32>
    %c4 = arith.constant 4 : index
    %c0_71 = arith.constant 0 : index
    %c0_72 = arith.constant 0 : index
    %225 = vector.load %arg10[%c4, %c0_71, %c0_72] : memref<8x2x192xf32, #tpu.memory_space<vmem>>, vector<1x2x192xf32>
    %226 = vector.shape_cast %225 : vector<1x2x192xf32> to vector<2x192xf32>
    %227 = vector.extract_strided_slice %219 {offsets = [0, 0], sizes = [2, 32], strides = [1, 1]} : vector<2x64xf32> to vector<2x32xf32>
    %228 = vector.extract_strided_slice %219 {offsets = [0, 32], sizes = [2, 32], strides = [1, 1]} : vector<2x64xf32> to vector<2x32xf32>
    %229 = vector.extract_strided_slice %224 {offsets = [0, 0], sizes = [2, 32], strides = [1, 1]} : vector<2x192xf32> to vector<2x32xf32>
    %230 = vector.extract_strided_slice %222 {offsets = [0, 0], sizes = [2, 32], strides = [1, 1]} : vector<2x192xf32> to vector<2x32xf32>
    %231 = arith.addf %229, %230 : vector<2x32xf32>
    %232 = arith.negf %231 : vector<2x32xf32>
    %233 = math.exp %232 : vector<2x32xf32>
    %cst_73 = arith.constant 1.000000e+00 : f32
    %234 = vector.broadcast %cst_73 : f32 to vector<2x32xf32>
    %235 = arith.addf %234, %233 : vector<2x32xf32>
    %236 = arith.divf %234, %235 : vector<2x32xf32>
    %237 = vector.extract_strided_slice %224 {offsets = [0, 32], sizes = [2, 32], strides = [1, 1]} : vector<2x192xf32> to vector<2x32xf32>
    %238 = vector.extract_strided_slice %222 {offsets = [0, 32], sizes = [2, 32], strides = [1, 1]} : vector<2x192xf32> to vector<2x32xf32>
    %239 = arith.addf %237, %238 : vector<2x32xf32>
    %240 = arith.negf %239 : vector<2x32xf32>
    %241 = math.exp %240 : vector<2x32xf32>
    %cst_74 = arith.constant 1.000000e+00 : f32
    %242 = vector.broadcast %cst_74 : f32 to vector<2x32xf32>
    %243 = arith.addf %242, %241 : vector<2x32xf32>
    %244 = arith.divf %242, %243 : vector<2x32xf32>
    %245 = vector.extract_strided_slice %224 {offsets = [0, 64], sizes = [2, 32], strides = [1, 1]} : vector<2x192xf32> to vector<2x32xf32>
    %246 = vector.extract_strided_slice %222 {offsets = [0, 64], sizes = [2, 32], strides = [1, 1]} : vector<2x192xf32> to vector<2x32xf32>
    %247 = arith.mulf %236, %246 : vector<2x32xf32>
    %248 = arith.addf %245, %247 : vector<2x32xf32>
    %249 = math.tanh %248 : vector<2x32xf32>
    %cst_75 = arith.constant 1.000000e+00 : f32
    %250 = vector.broadcast %cst_75 : f32 to vector<2x32xf32>
    %251 = arith.subf %250, %244 : vector<2x32xf32>
    %252 = arith.mulf %251, %249 : vector<2x32xf32>
    %253 = arith.mulf %244, %227 : vector<2x32xf32>
    %254 = arith.addf %252, %253 : vector<2x32xf32>
    %255 = vector.extract_strided_slice %226 {offsets = [0, 96], sizes = [2, 32], strides = [1, 1]} : vector<2x192xf32> to vector<2x32xf32>
    %256 = vector.extract_strided_slice %222 {offsets = [0, 96], sizes = [2, 32], strides = [1, 1]} : vector<2x192xf32> to vector<2x32xf32>
    %257 = arith.addf %255, %256 : vector<2x32xf32>
    %258 = arith.negf %257 : vector<2x32xf32>
    %259 = math.exp %258 : vector<2x32xf32>
    %cst_76 = arith.constant 1.000000e+00 : f32
    %260 = vector.broadcast %cst_76 : f32 to vector<2x32xf32>
    %261 = arith.addf %260, %259 : vector<2x32xf32>
    %262 = arith.divf %260, %261 : vector<2x32xf32>
    %263 = vector.extract_strided_slice %226 {offsets = [0, 128], sizes = [2, 32], strides = [1, 1]} : vector<2x192xf32> to vector<2x32xf32>
    %264 = vector.extract_strided_slice %222 {offsets = [0, 128], sizes = [2, 32], strides = [1, 1]} : vector<2x192xf32> to vector<2x32xf32>
    %265 = arith.addf %263, %264 : vector<2x32xf32>
    %266 = arith.negf %265 : vector<2x32xf32>
    %267 = math.exp %266 : vector<2x32xf32>
    %cst_77 = arith.constant 1.000000e+00 : f32
    %268 = vector.broadcast %cst_77 : f32 to vector<2x32xf32>
    %269 = arith.addf %268, %267 : vector<2x32xf32>
    %270 = arith.divf %268, %269 : vector<2x32xf32>
    %271 = vector.extract_strided_slice %226 {offsets = [0, 160], sizes = [2, 32], strides = [1, 1]} : vector<2x192xf32> to vector<2x32xf32>
    %272 = vector.extract_strided_slice %222 {offsets = [0, 160], sizes = [2, 32], strides = [1, 1]} : vector<2x192xf32> to vector<2x32xf32>
    %273 = arith.mulf %262, %272 : vector<2x32xf32>
    %274 = arith.addf %271, %273 : vector<2x32xf32>
    %275 = math.tanh %274 : vector<2x32xf32>
    %cst_78 = arith.constant 1.000000e+00 : f32
    %276 = vector.broadcast %cst_78 : f32 to vector<2x32xf32>
    %277 = arith.subf %276, %270 : vector<2x32xf32>
    %278 = arith.mulf %277, %275 : vector<2x32xf32>
    %279 = arith.mulf %270, %228 : vector<2x32xf32>
    %280 = arith.addf %278, %279 : vector<2x32xf32>
    %c3_79 = arith.constant 3 : index
    %c0_80 = arith.constant 0 : index
    %c0_81 = arith.constant 0 : index
    %281 = vector.load %arg11[%c3_79, %c0_80, %c0_81] : memref<8x2x32xf32, #tpu.memory_space<vmem>>, vector<1x2x32xf32>
    %282 = vector.shape_cast %281 : vector<1x2x32xf32> to vector<2x32xf32>
    %283 = vector.shape_cast %254 : vector<2x32xf32> to vector<1x2x32xf32>
    tpu.vector_store %arg11[%c3_79, %c0_80, %c0_81], %283 {strides = array<i32>} : memref<8x2x32xf32, #tpu.memory_space<vmem>>, vector<1x2x32xf32>,
    %c4_82 = arith.constant 4 : index
    %c0_83 = arith.constant 0 : index
    %c0_84 = arith.constant 0 : index
    %284 = vector.load %arg12[%c4_82, %c0_83, %c0_84] : memref<8x2x32xf32, #tpu.memory_space<vmem>>, vector<1x2x32xf32>
    %285 = vector.shape_cast %284 : vector<1x2x32xf32> to vector<2x32xf32>
    %286 = vector.shape_cast %280 : vector<2x32xf32> to vector<1x2x32xf32>
    tpu.vector_store %arg12[%c4_82, %c0_83, %c0_84], %286 {strides = array<i32>} : memref<8x2x32xf32, #tpu.memory_space<vmem>>, vector<1x2x32xf32>,
    %287 = tpu.concatenate %254, %280 in 1 : vector<2x32xf32>, vector<2x32xf32> -> vector<2x64xf32>
    %cst_85 = arith.constant dense<0.000000e+00> : vector<2x192xf32>
    %288 = tpu.matmul %287, %13, %cst_85 {dimension_numbers = #tpu.dot_dimension_numbers<[1], [0], [0], [1], [0, 0, 1, 1], [], []>} : vector<2x64xf32>, vector<64x192xf32>, vector<2x192xf32> -> vector<2x192xf32>
    %289 = vector.broadcast %14 : vector<1x192xf32> to vector<2x192xf32>
    %290 = arith.addf %288, %289 : vector<2x192xf32>
    %c4_86 = arith.constant 4 : index
    %c0_87 = arith.constant 0 : index
    %c0_88 = arith.constant 0 : index
    %291 = vector.load %arg10[%c4_86, %c0_87, %c0_88] : memref<8x2x192xf32, #tpu.memory_space<vmem>>, vector<1x2x192xf32>
    %292 = vector.shape_cast %291 : vector<1x2x192xf32> to vector<2x192xf32>
    %c3_89 = arith.constant 3 : index
    %c0_90 = arith.constant 0 : index
    %c0_91 = arith.constant 0 : index
    %293 = vector.load %arg10[%c3_89, %c0_90, %c0_91] : memref<8x2x192xf32, #tpu.memory_space<vmem>>, vector<1x2x192xf32>
    %294 = vector.shape_cast %293 : vector<1x2x192xf32> to vector<2x192xf32>
    %295 = vector.extract_strided_slice %287 {offsets = [0, 0], sizes = [2, 32], strides = [1, 1]} : vector<2x64xf32> to vector<2x32xf32>
    %296 = vector.extract_strided_slice %287 {offsets = [0, 32], sizes = [2, 32], strides = [1, 1]} : vector<2x64xf32> to vector<2x32xf32>
    %297 = vector.extract_strided_slice %292 {offsets = [0, 0], sizes = [2, 32], strides = [1, 1]} : vector<2x192xf32> to vector<2x32xf32>
    %298 = vector.extract_strided_slice %290 {offsets = [0, 0], sizes = [2, 32], strides = [1, 1]} : vector<2x192xf32> to vector<2x32xf32>
    %299 = arith.addf %297, %298 : vector<2x32xf32>
    %300 = arith.negf %299 : vector<2x32xf32>
    %301 = math.exp %300 : vector<2x32xf32>
    %cst_92 = arith.constant 1.000000e+00 : f32
    %302 = vector.broadcast %cst_92 : f32 to vector<2x32xf32>
    %303 = arith.addf %302, %301 : vector<2x32xf32>
    %304 = arith.divf %302, %303 : vector<2x32xf32>
    %305 = vector.extract_strided_slice %292 {offsets = [0, 32], sizes = [2, 32], strides = [1, 1]} : vector<2x192xf32> to vector<2x32xf32>
    %306 = vector.extract_strided_slice %290 {offsets = [0, 32], sizes = [2, 32], strides = [1, 1]} : vector<2x192xf32> to vector<2x32xf32>
    %307 = arith.addf %305, %306 : vector<2x32xf32>
    %308 = arith.negf %307 : vector<2x32xf32>
    %309 = math.exp %308 : vector<2x32xf32>
    %cst_93 = arith.constant 1.000000e+00 : f32
    %310 = vector.broadcast %cst_93 : f32 to vector<2x32xf32>
    %311 = arith.addf %310, %309 : vector<2x32xf32>
    %312 = arith.divf %310, %311 : vector<2x32xf32>
    %313 = vector.extract_strided_slice %292 {offsets = [0, 64], sizes = [2, 32], strides = [1, 1]} : vector<2x192xf32> to vector<2x32xf32>
    %314 = vector.extract_strided_slice %290 {offsets = [0, 64], sizes = [2, 32], strides = [1, 1]} : vector<2x192xf32> to vector<2x32xf32>
    %315 = arith.mulf %304, %314 : vector<2x32xf32>
    %316 = arith.addf %313, %315 : vector<2x32xf32>
    %317 = math.tanh %316 : vector<2x32xf32>
    %cst_94 = arith.constant 1.000000e+00 : f32
    %318 = vector.broadcast %cst_94 : f32 to vector<2x32xf32>
    %319 = arith.subf %318, %312 : vector<2x32xf32>
    %320 = arith.mulf %319, %317 : vector<2x32xf32>
    %321 = arith.mulf %312, %295 : vector<2x32xf32>
    %322 = arith.addf %320, %321 : vector<2x32xf32>
    %323 = vector.extract_strided_slice %294 {offsets = [0, 96], sizes = [2, 32], strides = [1, 1]} : vector<2x192xf32> to vector<2x32xf32>
    %324 = vector.extract_strided_slice %290 {offsets = [0, 96], sizes = [2, 32], strides = [1, 1]} : vector<2x192xf32> to vector<2x32xf32>
    %325 = arith.addf %323, %324 : vector<2x32xf32>
    %326 = arith.negf %325 : vector<2x32xf32>
    %327 = math.exp %326 : vector<2x32xf32>
    %cst_95 = arith.constant 1.000000e+00 : f32
    %328 = vector.broadcast %cst_95 : f32 to vector<2x32xf32>
    %329 = arith.addf %328, %327 : vector<2x32xf32>
    %330 = arith.divf %328, %329 : vector<2x32xf32>
    %331 = vector.extract_strided_slice %294 {offsets = [0, 128], sizes = [2, 32], strides = [1, 1]} : vector<2x192xf32> to vector<2x32xf32>
    %332 = vector.extract_strided_slice %290 {offsets = [0, 128], sizes = [2, 32], strides = [1, 1]} : vector<2x192xf32> to vector<2x32xf32>
    %333 = arith.addf %331, %332 : vector<2x32xf32>
    %334 = arith.negf %333 : vector<2x32xf32>
    %335 = math.exp %334 : vector<2x32xf32>
    %cst_96 = arith.constant 1.000000e+00 : f32
    %336 = vector.broadcast %cst_96 : f32 to vector<2x32xf32>
    %337 = arith.addf %336, %335 : vector<2x32xf32>
    %338 = arith.divf %336, %337 : vector<2x32xf32>
    %339 = vector.extract_strided_slice %294 {offsets = [0, 160], sizes = [2, 32], strides = [1, 1]} : vector<2x192xf32> to vector<2x32xf32>
    %340 = vector.extract_strided_slice %290 {offsets = [0, 160], sizes = [2, 32], strides = [1, 1]} : vector<2x192xf32> to vector<2x32xf32>
    %341 = arith.mulf %330, %340 : vector<2x32xf32>
    %342 = arith.addf %339, %341 : vector<2x32xf32>
    %343 = math.tanh %342 : vector<2x32xf32>
    %cst_97 = arith.constant 1.000000e+00 : f32
    %344 = vector.broadcast %cst_97 : f32 to vector<2x32xf32>
    %345 = arith.subf %344, %338 : vector<2x32xf32>
    %346 = arith.mulf %345, %343 : vector<2x32xf32>
    %347 = arith.mulf %338, %296 : vector<2x32xf32>
    %348 = arith.addf %346, %347 : vector<2x32xf32>
    %c4_98 = arith.constant 4 : index
    %c0_99 = arith.constant 0 : index
    %c0_100 = arith.constant 0 : index
    %349 = vector.load %arg11[%c4_98, %c0_99, %c0_100] : memref<8x2x32xf32, #tpu.memory_space<vmem>>, vector<1x2x32xf32>
    %350 = vector.shape_cast %349 : vector<1x2x32xf32> to vector<2x32xf32>
    %351 = vector.shape_cast %322 : vector<2x32xf32> to vector<1x2x32xf32>
    tpu.vector_store %arg11[%c4_98, %c0_99, %c0_100], %351 {strides = array<i32>} : memref<8x2x32xf32, #tpu.memory_space<vmem>>, vector<1x2x32xf32>,
    %c3_101 = arith.constant 3 : index
    %c0_102 = arith.constant 0 : index
    %c0_103 = arith.constant 0 : index
    %352 = vector.load %arg12[%c3_101, %c0_102, %c0_103] : memref<8x2x32xf32, #tpu.memory_space<vmem>>, vector<1x2x32xf32>
    %353 = vector.shape_cast %352 : vector<1x2x32xf32> to vector<2x32xf32>
    %354 = vector.shape_cast %348 : vector<2x32xf32> to vector<1x2x32xf32>
    tpu.vector_store %arg12[%c3_101, %c0_102, %c0_103], %354 {strides = array<i32>} : memref<8x2x32xf32, #tpu.memory_space<vmem>>, vector<1x2x32xf32>,
    %355 = tpu.concatenate %322, %348 in 1 : vector<2x32xf32>, vector<2x32xf32> -> vector<2x64xf32>
    %cst_104 = arith.constant dense<0.000000e+00> : vector<2x192xf32>
    %356 = tpu.matmul %355, %13, %cst_104 {dimension_numbers = #tpu.dot_dimension_numbers<[1], [0], [0], [1], [0, 0, 1, 1], [], []>} : vector<2x64xf32>, vector<64x192xf32>, vector<2x192xf32> -> vector<2x192xf32>
    %357 = vector.broadcast %14 : vector<1x192xf32> to vector<2x192xf32>
    %358 = arith.addf %356, %357 : vector<2x192xf32>
    %c5_105 = arith.constant 5 : index
    %c0_106 = arith.constant 0 : index
    %c0_107 = arith.constant 0 : index
    %359 = vector.load %arg10[%c5_105, %c0_106, %c0_107] : memref<8x2x192xf32, #tpu.memory_space<vmem>>, vector<1x2x192xf32>
    %360 = vector.shape_cast %359 : vector<1x2x192xf32> to vector<2x192xf32>
    %c2_108 = arith.constant 2 : index
    %c0_109 = arith.constant 0 : index
    %c0_110 = arith.constant 0 : index
    %361 = vector.load %arg10[%c2_108, %c0_109, %c0_110] : memref<8x2x192xf32, #tpu.memory_space<vmem>>, vector<1x2x192xf32>
    %362 = vector.shape_cast %361 : vector<1x2x192xf32> to vector<2x192xf32>
    %363 = vector.extract_strided_slice %355 {offsets = [0, 0], sizes = [2, 32], strides = [1, 1]} : vector<2x64xf32> to vector<2x32xf32>
    %364 = vector.extract_strided_slice %355 {offsets = [0, 32], sizes = [2, 32], strides = [1, 1]} : vector<2x64xf32> to vector<2x32xf32>
    %365 = vector.extract_strided_slice %360 {offsets = [0, 0], sizes = [2, 32], strides = [1, 1]} : vector<2x192xf32> to vector<2x32xf32>
    %366 = vector.extract_strided_slice %358 {offsets = [0, 0], sizes = [2, 32], strides = [1, 1]} : vector<2x192xf32> to vector<2x32xf32>
    %367 = arith.addf %365, %366 : vector<2x32xf32>
    %368 = arith.negf %367 : vector<2x32xf32>
    %369 = math.exp %368 : vector<2x32xf32>
    %cst_111 = arith.constant 1.000000e+00 : f32
    %370 = vector.broadcast %cst_111 : f32 to vector<2x32xf32>
    %371 = arith.addf %370, %369 : vector<2x32xf32>
    %372 = arith.divf %370, %371 : vector<2x32xf32>
    %373 = vector.extract_strided_slice %360 {offsets = [0, 32], sizes = [2, 32], strides = [1, 1]} : vector<2x192xf32> to vector<2x32xf32>
    %374 = vector.extract_strided_slice %358 {offsets = [0, 32], sizes = [2, 32], strides = [1, 1]} : vector<2x192xf32> to vector<2x32xf32>
    %375 = arith.addf %373, %374 : vector<2x32xf32>
    %376 = arith.negf %375 : vector<2x32xf32>
    %377 = math.exp %376 : vector<2x32xf32>
    %cst_112 = arith.constant 1.000000e+00 : f32
    %378 = vector.broadcast %cst_112 : f32 to vector<2x32xf32>
    %379 = arith.addf %378, %377 : vector<2x32xf32>
    %380 = arith.divf %378, %379 : vector<2x32xf32>
    %381 = vector.extract_strided_slice %360 {offsets = [0, 64], sizes = [2, 32], strides = [1, 1]} : vector<2x192xf32> to vector<2x32xf32>
    %382 = vector.extract_strided_slice %358 {offsets = [0, 64], sizes = [2, 32], strides = [1, 1]} : vector<2x192xf32> to vector<2x32xf32>
    %383 = arith.mulf %372, %382 : vector<2x32xf32>
    %384 = arith.addf %381, %383 : vector<2x32xf32>
    %385 = math.tanh %384 : vector<2x32xf32>
    %cst_113 = arith.constant 1.000000e+00 : f32
    %386 = vector.broadcast %cst_113 : f32 to vector<2x32xf32>
    %387 = arith.subf %386, %380 : vector<2x32xf32>
    %388 = arith.mulf %387, %385 : vector<2x32xf32>
    %389 = arith.mulf %380, %363 : vector<2x32xf32>
    %390 = arith.addf %388, %389 : vector<2x32xf32>
    %391 = vector.extract_strided_slice %362 {offsets = [0, 96], sizes = [2, 32], strides = [1, 1]} : vector<2x192xf32> to vector<2x32xf32>
    %392 = vector.extract_strided_slice %358 {offsets = [0, 96], sizes = [2, 32], strides = [1, 1]} : vector<2x192xf32> to vector<2x32xf32>
    %393 = arith.addf %391, %392 : vector<2x32xf32>
    %394 = arith.negf %393 : vector<2x32xf32>
    %395 = math.exp %394 : vector<2x32xf32>
    %cst_114 = arith.constant 1.000000e+00 : f32
    %396 = vector.broadcast %cst_114 : f32 to vector<2x32xf32>
    %397 = arith.addf %396, %395 : vector<2x32xf32>
    %398 = arith.divf %396, %397 : vector<2x32xf32>
    %399 = vector.extract_strided_slice %362 {offsets = [0, 128], sizes = [2, 32], strides = [1, 1]} : vector<2x192xf32> to vector<2x32xf32>
    %400 = vector.extract_strided_slice %358 {offsets = [0, 128], sizes = [2, 32], strides = [1, 1]} : vector<2x192xf32> to vector<2x32xf32>
    %401 = arith.addf %399, %400 : vector<2x32xf32>
    %402 = arith.negf %401 : vector<2x32xf32>
    %403 = math.exp %402 : vector<2x32xf32>
    %cst_115 = arith.constant 1.000000e+00 : f32
    %404 = vector.broadcast %cst_115 : f32 to vector<2x32xf32>
    %405 = arith.addf %404, %403 : vector<2x32xf32>
    %406 = arith.divf %404, %405 : vector<2x32xf32>
    %407 = vector.extract_strided_slice %362 {offsets = [0, 160], sizes = [2, 32], strides = [1, 1]} : vector<2x192xf32> to vector<2x32xf32>
    %408 = vector.extract_strided_slice %358 {offsets = [0, 160], sizes = [2, 32], strides = [1, 1]} : vector<2x192xf32> to vector<2x32xf32>
    %409 = arith.mulf %398, %408 : vector<2x32xf32>
    %410 = arith.addf %407, %409 : vector<2x32xf32>
    %411 = math.tanh %410 : vector<2x32xf32>
    %cst_116 = arith.constant 1.000000e+00 : f32
    %412 = vector.broadcast %cst_116 : f32 to vector<2x32xf32>
    %413 = arith.subf %412, %406 : vector<2x32xf32>
    %414 = arith.mulf %413, %411 : vector<2x32xf32>
    %415 = arith.mulf %406, %364 : vector<2x32xf32>
    %416 = arith.addf %414, %415 : vector<2x32xf32>
    %c5_117 = arith.constant 5 : index
    %c0_118 = arith.constant 0 : index
    %c0_119 = arith.constant 0 : index
    %417 = vector.load %arg11[%c5_117, %c0_118, %c0_119] : memref<8x2x32xf32, #tpu.memory_space<vmem>>, vector<1x2x32xf32>
    %418 = vector.shape_cast %417 : vector<1x2x32xf32> to vector<2x32xf32>
    %419 = vector.shape_cast %390 : vector<2x32xf32> to vector<1x2x32xf32>
    tpu.vector_store %arg11[%c5_117, %c0_118, %c0_119], %419 {strides = array<i32>} : memref<8x2x32xf32, #tpu.memory_space<vmem>>, vector<1x2x32xf32>,
    %c2_120 = arith.constant 2 : index
    %c0_121 = arith.constant 0 : index
    %c0_122 = arith.constant 0 : index
    %420 = vector.load %arg12[%c2_120, %c0_121, %c0_122] : memref<8x2x32xf32, #tpu.memory_space<vmem>>, vector<1x2x32xf32>
    %421 = vector.shape_cast %420 : vector<1x2x32xf32> to vector<2x32xf32>
    %422 = vector.shape_cast %416 : vector<2x32xf32> to vector<1x2x32xf32>
    tpu.vector_store %arg12[%c2_120, %c0_121, %c0_122], %422 {strides = array<i32>} : memref<8x2x32xf32, #tpu.memory_space<vmem>>, vector<1x2x32xf32>,
    %423 = tpu.concatenate %390, %416 in 1 : vector<2x32xf32>, vector<2x32xf32> -> vector<2x64xf32>
    %cst_123 = arith.constant dense<0.000000e+00> : vector<2x192xf32>
    %424 = tpu.matmul %423, %13, %cst_123 {dimension_numbers = #tpu.dot_dimension_numbers<[1], [0], [0], [1], [0, 0, 1, 1], [], []>} : vector<2x64xf32>, vector<64x192xf32>, vector<2x192xf32> -> vector<2x192xf32>
    %425 = vector.broadcast %14 : vector<1x192xf32> to vector<2x192xf32>
    %426 = arith.addf %424, %425 : vector<2x192xf32>
    %c6_124 = arith.constant 6 : index
    %c0_125 = arith.constant 0 : index
    %c0_126 = arith.constant 0 : index
    %427 = vector.load %arg10[%c6_124, %c0_125, %c0_126] : memref<8x2x192xf32, #tpu.memory_space<vmem>>, vector<1x2x192xf32>
    %428 = vector.shape_cast %427 : vector<1x2x192xf32> to vector<2x192xf32>
    %c1_127 = arith.constant 1 : index
    %c0_128 = arith.constant 0 : index
    %c0_129 = arith.constant 0 : index
    %429 = vector.load %arg10[%c1_127, %c0_128, %c0_129] : memref<8x2x192xf32, #tpu.memory_space<vmem>>, vector<1x2x192xf32>
    %430 = vector.shape_cast %429 : vector<1x2x192xf32> to vector<2x192xf32>
    %431 = vector.extract_strided_slice %423 {offsets = [0, 0], sizes = [2, 32], strides = [1, 1]} : vector<2x64xf32> to vector<2x32xf32>
    %432 = vector.extract_strided_slice %423 {offsets = [0, 32], sizes = [2, 32], strides = [1, 1]} : vector<2x64xf32> to vector<2x32xf32>
    %433 = vector.extract_strided_slice %428 {offsets = [0, 0], sizes = [2, 32], strides = [1, 1]} : vector<2x192xf32> to vector<2x32xf32>
    %434 = vector.extract_strided_slice %426 {offsets = [0, 0], sizes = [2, 32], strides = [1, 1]} : vector<2x192xf32> to vector<2x32xf32>
    %435 = arith.addf %433, %434 : vector<2x32xf32>
    %436 = arith.negf %435 : vector<2x32xf32>
    %437 = math.exp %436 : vector<2x32xf32>
    %cst_130 = arith.constant 1.000000e+00 : f32
    %438 = vector.broadcast %cst_130 : f32 to vector<2x32xf32>
    %439 = arith.addf %438, %437 : vector<2x32xf32>
    %440 = arith.divf %438, %439 : vector<2x32xf32>
    %441 = vector.extract_strided_slice %428 {offsets = [0, 32], sizes = [2, 32], strides = [1, 1]} : vector<2x192xf32> to vector<2x32xf32>
    %442 = vector.extract_strided_slice %426 {offsets = [0, 32], sizes = [2, 32], strides = [1, 1]} : vector<2x192xf32> to vector<2x32xf32>
    %443 = arith.addf %441, %442 : vector<2x32xf32>
    %444 = arith.negf %443 : vector<2x32xf32>
    %445 = math.exp %444 : vector<2x32xf32>
    %cst_131 = arith.constant 1.000000e+00 : f32
    %446 = vector.broadcast %cst_131 : f32 to vector<2x32xf32>
    %447 = arith.addf %446, %445 : vector<2x32xf32>
    %448 = arith.divf %446, %447 : vector<2x32xf32>
    %449 = vector.extract_strided_slice %428 {offsets = [0, 64], sizes = [2, 32], strides = [1, 1]} : vector<2x192xf32> to vector<2x32xf32>
    %450 = vector.extract_strided_slice %426 {offsets = [0, 64], sizes = [2, 32], strides = [1, 1]} : vector<2x192xf32> to vector<2x32xf32>
    %451 = arith.mulf %440, %450 : vector<2x32xf32>
    %452 = arith.addf %449, %451 : vector<2x32xf32>
    %453 = math.tanh %452 : vector<2x32xf32>
    %cst_132 = arith.constant 1.000000e+00 : f32
    %454 = vector.broadcast %cst_132 : f32 to vector<2x32xf32>
    %455 = arith.subf %454, %448 : vector<2x32xf32>
    %456 = arith.mulf %455, %453 : vector<2x32xf32>
    %457 = arith.mulf %448, %431 : vector<2x32xf32>
    %458 = arith.addf %456, %457 : vector<2x32xf32>
    %459 = vector.extract_strided_slice %430 {offsets = [0, 96], sizes = [2, 32], strides = [1, 1]} : vector<2x192xf32> to vector<2x32xf32>
    %460 = vector.extract_strided_slice %426 {offsets = [0, 96], sizes = [2, 32], strides = [1, 1]} : vector<2x192xf32> to vector<2x32xf32>
    %461 = arith.addf %459, %460 : vector<2x32xf32>
    %462 = arith.negf %461 : vector<2x32xf32>
    %463 = math.exp %462 : vector<2x32xf32>
    %cst_133 = arith.constant 1.000000e+00 : f32
    %464 = vector.broadcast %cst_133 : f32 to vector<2x32xf32>
    %465 = arith.addf %464, %463 : vector<2x32xf32>
    %466 = arith.divf %464, %465 : vector<2x32xf32>
    %467 = vector.extract_strided_slice %430 {offsets = [0, 128], sizes = [2, 32], strides = [1, 1]} : vector<2x192xf32> to vector<2x32xf32>
    %468 = vector.extract_strided_slice %426 {offsets = [0, 128], sizes = [2, 32], strides = [1, 1]} : vector<2x192xf32> to vector<2x32xf32>
    %469 = arith.addf %467, %468 : vector<2x32xf32>
    %470 = arith.negf %469 : vector<2x32xf32>
    %471 = math.exp %470 : vector<2x32xf32>
    %cst_134 = arith.constant 1.000000e+00 : f32
    %472 = vector.broadcast %cst_134 : f32 to vector<2x32xf32>
    %473 = arith.addf %472, %471 : vector<2x32xf32>
    %474 = arith.divf %472, %473 : vector<2x32xf32>
    %475 = vector.extract_strided_slice %430 {offsets = [0, 160], sizes = [2, 32], strides = [1, 1]} : vector<2x192xf32> to vector<2x32xf32>
    %476 = vector.extract_strided_slice %426 {offsets = [0, 160], sizes = [2, 32], strides = [1, 1]} : vector<2x192xf32> to vector<2x32xf32>
    %477 = arith.mulf %466, %476 : vector<2x32xf32>
    %478 = arith.addf %475, %477 : vector<2x32xf32>
    %479 = math.tanh %478 : vector<2x32xf32>
    %cst_135 = arith.constant 1.000000e+00 : f32
    %480 = vector.broadcast %cst_135 : f32 to vector<2x32xf32>
    %481 = arith.subf %480, %474 : vector<2x32xf32>
    %482 = arith.mulf %481, %479 : vector<2x32xf32>
    %483 = arith.mulf %474, %432 : vector<2x32xf32>
    %484 = arith.addf %482, %483 : vector<2x32xf32>
    %c6_136 = arith.constant 6 : index
    %c0_137 = arith.constant 0 : index
    %c0_138 = arith.constant 0 : index
    %485 = vector.load %arg11[%c6_136, %c0_137, %c0_138] : memref<8x2x32xf32, #tpu.memory_space<vmem>>, vector<1x2x32xf32>
    %486 = vector.shape_cast %485 : vector<1x2x32xf32> to vector<2x32xf32>
    %487 = vector.shape_cast %458 : vector<2x32xf32> to vector<1x2x32xf32>
    tpu.vector_store %arg11[%c6_136, %c0_137, %c0_138], %487 {strides = array<i32>} : memref<8x2x32xf32, #tpu.memory_space<vmem>>, vector<1x2x32xf32>,
    %c1_139 = arith.constant 1 : index
    %c0_140 = arith.constant 0 : index
    %c0_141 = arith.constant 0 : index
    %488 = vector.load %arg12[%c1_139, %c0_140, %c0_141] : memref<8x2x32xf32, #tpu.memory_space<vmem>>, vector<1x2x32xf32>
    %489 = vector.shape_cast %488 : vector<1x2x32xf32> to vector<2x32xf32>
    %490 = vector.shape_cast %484 : vector<2x32xf32> to vector<1x2x32xf32>
    tpu.vector_store %arg12[%c1_139, %c0_140, %c0_141], %490 {strides = array<i32>} : memref<8x2x32xf32, #tpu.memory_space<vmem>>, vector<1x2x32xf32>,
    %491 = tpu.concatenate %458, %484 in 1 : vector<2x32xf32>, vector<2x32xf32> -> vector<2x64xf32>
    %cst_142 = arith.constant dense<0.000000e+00> : vector<2x192xf32>
    %492 = tpu.matmul %491, %13, %cst_142 {dimension_numbers = #tpu.dot_dimension_numbers<[1], [0], [0], [1], [0, 0, 1, 1], [], []>} : vector<2x64xf32>, vector<64x192xf32>, vector<2x192xf32> -> vector<2x192xf32>
    %493 = vector.broadcast %14 : vector<1x192xf32> to vector<2x192xf32>
    %494 = arith.addf %492, %493 : vector<2x192xf32>
    %c7_143 = arith.constant 7 : index
    %c0_144 = arith.constant 0 : index
    %c0_145 = arith.constant 0 : index
    %495 = vector.load %arg10[%c7_143, %c0_144, %c0_145] : memref<8x2x192xf32, #tpu.memory_space<vmem>>, vector<1x2x192xf32>
    %496 = vector.shape_cast %495 : vector<1x2x192xf32> to vector<2x192xf32>
    %c0_146 = arith.constant 0 : index
    %c0_147 = arith.constant 0 : index
    %c0_148 = arith.constant 0 : index
    %497 = vector.load %arg10[%c0_146, %c0_147, %c0_148] : memref<8x2x192xf32, #tpu.memory_space<vmem>>, vector<1x2x192xf32>
    %498 = vector.shape_cast %497 : vector<1x2x192xf32> to vector<2x192xf32>
    %499 = vector.extract_strided_slice %491 {offsets = [0, 0], sizes = [2, 32], strides = [1, 1]} : vector<2x64xf32> to vector<2x32xf32>
    %500 = vector.extract_strided_slice %491 {offsets = [0, 32], sizes = [2, 32], strides = [1, 1]} : vector<2x64xf32> to vector<2x32xf32>
    %501 = vector.extract_strided_slice %496 {offsets = [0, 0], sizes = [2, 32], strides = [1, 1]} : vector<2x192xf32> to vector<2x32xf32>
    %502 = vector.extract_strided_slice %494 {offsets = [0, 0], sizes = [2, 32], strides = [1, 1]} : vector<2x192xf32> to vector<2x32xf32>
    %503 = arith.addf %501, %502 : vector<2x32xf32>
    %504 = arith.negf %503 : vector<2x32xf32>
    %505 = math.exp %504 : vector<2x32xf32>
    %cst_149 = arith.constant 1.000000e+00 : f32
    %506 = vector.broadcast %cst_149 : f32 to vector<2x32xf32>
    %507 = arith.addf %506, %505 : vector<2x32xf32>
    %508 = arith.divf %506, %507 : vector<2x32xf32>
    %509 = vector.extract_strided_slice %496 {offsets = [0, 32], sizes = [2, 32], strides = [1, 1]} : vector<2x192xf32> to vector<2x32xf32>
    %510 = vector.extract_strided_slice %494 {offsets = [0, 32], sizes = [2, 32], strides = [1, 1]} : vector<2x192xf32> to vector<2x32xf32>
    %511 = arith.addf %509, %510 : vector<2x32xf32>
    %512 = arith.negf %511 : vector<2x32xf32>
    %513 = math.exp %512 : vector<2x32xf32>
    %cst_150 = arith.constant 1.000000e+00 : f32
    %514 = vector.broadcast %cst_150 : f32 to vector<2x32xf32>
    %515 = arith.addf %514, %513 : vector<2x32xf32>
    %516 = arith.divf %514, %515 : vector<2x32xf32>
    %517 = vector.extract_strided_slice %496 {offsets = [0, 64], sizes = [2, 32], strides = [1, 1]} : vector<2x192xf32> to vector<2x32xf32>
    %518 = vector.extract_strided_slice %494 {offsets = [0, 64], sizes = [2, 32], strides = [1, 1]} : vector<2x192xf32> to vector<2x32xf32>
    %519 = arith.mulf %508, %518 : vector<2x32xf32>
    %520 = arith.addf %517, %519 : vector<2x32xf32>
    %521 = math.tanh %520 : vector<2x32xf32>
    %cst_151 = arith.constant 1.000000e+00 : f32
    %522 = vector.broadcast %cst_151 : f32 to vector<2x32xf32>
    %523 = arith.subf %522, %516 : vector<2x32xf32>
    %524 = arith.mulf %523, %521 : vector<2x32xf32>
    %525 = arith.mulf %516, %499 : vector<2x32xf32>
    %526 = arith.addf %524, %525 : vector<2x32xf32>
    %527 = vector.extract_strided_slice %498 {offsets = [0, 96], sizes = [2, 32], strides = [1, 1]} : vector<2x192xf32> to vector<2x32xf32>
    %528 = vector.extract_strided_slice %494 {offsets = [0, 96], sizes = [2, 32], strides = [1, 1]} : vector<2x192xf32> to vector<2x32xf32>
    %529 = arith.addf %527, %528 : vector<2x32xf32>
    %530 = arith.negf %529 : vector<2x32xf32>
    %531 = math.exp %530 : vector<2x32xf32>
    %cst_152 = arith.constant 1.000000e+00 : f32
    %532 = vector.broadcast %cst_152 : f32 to vector<2x32xf32>
    %533 = arith.addf %532, %531 : vector<2x32xf32>
    %534 = arith.divf %532, %533 : vector<2x32xf32>
    %535 = vector.extract_strided_slice %498 {offsets = [0, 128], sizes = [2, 32], strides = [1, 1]} : vector<2x192xf32> to vector<2x32xf32>
    %536 = vector.extract_strided_slice %494 {offsets = [0, 128], sizes = [2, 32], strides = [1, 1]} : vector<2x192xf32> to vector<2x32xf32>
    %537 = arith.addf %535, %536 : vector<2x32xf32>
    %538 = arith.negf %537 : vector<2x32xf32>
    %539 = math.exp %538 : vector<2x32xf32>
    %cst_153 = arith.constant 1.000000e+00 : f32
    %540 = vector.broadcast %cst_153 : f32 to vector<2x32xf32>
    %541 = arith.addf %540, %539 : vector<2x32xf32>
    %542 = arith.divf %540, %541 : vector<2x32xf32>
    %543 = vector.extract_strided_slice %498 {offsets = [0, 160], sizes = [2, 32], strides = [1, 1]} : vector<2x192xf32> to vector<2x32xf32>
    %544 = vector.extract_strided_slice %494 {offsets = [0, 160], sizes = [2, 32], strides = [1, 1]} : vector<2x192xf32> to vector<2x32xf32>
    %545 = arith.mulf %534, %544 : vector<2x32xf32>
    %546 = arith.addf %543, %545 : vector<2x32xf32>
    %547 = math.tanh %546 : vector<2x32xf32>
    %cst_154 = arith.constant 1.000000e+00 : f32
    %548 = vector.broadcast %cst_154 : f32 to vector<2x32xf32>
    %549 = arith.subf %548, %542 : vector<2x32xf32>
    %550 = arith.mulf %549, %547 : vector<2x32xf32>
    %551 = arith.mulf %542, %500 : vector<2x32xf32>
    %552 = arith.addf %550, %551 : vector<2x32xf32>
    %c7_155 = arith.constant 7 : index
    %c0_156 = arith.constant 0 : index
    %c0_157 = arith.constant 0 : index
    %553 = vector.load %arg11[%c7_155, %c0_156, %c0_157] : memref<8x2x32xf32, #tpu.memory_space<vmem>>, vector<1x2x32xf32>
    %554 = vector.shape_cast %553 : vector<1x2x32xf32> to vector<2x32xf32>
    %555 = vector.shape_cast %526 : vector<2x32xf32> to vector<1x2x32xf32>
    tpu.vector_store %arg11[%c7_155, %c0_156, %c0_157], %555 {strides = array<i32>} : memref<8x2x32xf32, #tpu.memory_space<vmem>>, vector<1x2x32xf32>,
    %c0_158 = arith.constant 0 : index
    %c0_159 = arith.constant 0 : index
    %c0_160 = arith.constant 0 : index
    %556 = vector.load %arg12[%c0_158, %c0_159, %c0_160] : memref<8x2x32xf32, #tpu.memory_space<vmem>>, vector<1x2x32xf32>
    %557 = vector.shape_cast %556 : vector<1x2x32xf32> to vector<2x32xf32>
    %558 = vector.shape_cast %552 : vector<2x32xf32> to vector<1x2x32xf32>
    tpu.vector_store %arg12[%c0_158, %c0_159, %c0_160], %558 {strides = array<i32>} : memref<8x2x32xf32, #tpu.memory_space<vmem>>, vector<1x2x32xf32>,
    %559 = tpu.concatenate %526, %552 in 1 : vector<2x32xf32>, vector<2x32xf32> -> vector<2x64xf32>
    %560 = vector.extract_strided_slice %559 {offsets = [0, 0], sizes = [2, 32], strides = [1, 1]} : vector<2x64xf32> to vector<2x32xf32>
    %c0_161 = arith.constant 0 : index
    %c0_162 = arith.constant 0 : index
    %c0_163 = arith.constant 0 : index
    %561 = vector.load %arg9[%c0_161, %c0_162, %c0_163] : memref<2x2x32xf32, #tpu.memory_space<vmem>>, vector<1x2x32xf32>
    %562 = vector.shape_cast %561 : vector<1x2x32xf32> to vector<2x32xf32>
    %563 = vector.shape_cast %560 : vector<2x32xf32> to vector<1x2x32xf32>
    tpu.vector_store %arg9[%c0_161, %c0_162, %c0_163], %563 {strides = array<i32>} : memref<2x2x32xf32, #tpu.memory_space<vmem>>, vector<1x2x32xf32>,
    %564 = vector.extract_strided_slice %559 {offsets = [0, 32], sizes = [2, 32], strides = [1, 1]} : vector<2x64xf32> to vector<2x32xf32>
    %c1_164 = arith.constant 1 : index
    %c0_165 = arith.constant 0 : index
    %c0_166 = arith.constant 0 : index
    %565 = vector.load %arg9[%c1_164, %c0_165, %c0_166] : memref<2x2x32xf32, #tpu.memory_space<vmem>>, vector<1x2x32xf32>
    %566 = vector.shape_cast %565 : vector<1x2x32xf32> to vector<2x32xf32>
    %567 = vector.shape_cast %564 : vector<2x32xf32> to vector<1x2x32xf32>
    tpu.vector_store %arg9[%c1_164, %c0_165, %c0_166], %567 {strides = array<i32>} : memref<2x2x32xf32, #tpu.memory_space<vmem>>, vector<1x2x32xf32>,
    %c0_167 = arith.constant 0 : index
    %c0_168 = arith.constant 0 : index
    %c0_169 = arith.constant 0 : index
    %568 = vector.load %arg11[%c0_167, %c0_168, %c0_169] : memref<8x2x32xf32, #tpu.memory_space<vmem>>, vector<8x2x32xf32>
    %c0_170 = arith.constant 0 : index
    %c0_171 = arith.constant 0 : index
    %c0_172 = arith.constant 0 : index
    %569 = vector.load %arg12[%c0_170, %c0_171, %c0_172] : memref<8x2x32xf32, #tpu.memory_space<vmem>>, vector<8x2x32xf32>
    %570 = tpu.concatenate %568, %569 in 2 : vector<8x2x32xf32>, vector<8x2x32xf32> -> vector<8x2x64xf32>
    %571 = vector.shape_cast %570 : vector<8x2x64xf32> to vector<16x64xf32>
    %c0_173 = arith.constant 0 : index
    %c0_174 = arith.constant 0 : index
    %572 = vector.load %arg6[%c0_173, %c0_174] : memref<64x32xf32, #tpu.memory_space<vmem>>, vector<64x32xf32>
    %cst_175 = arith.constant dense<0.000000e+00> : vector<16x32xf32>
    %573 = tpu.matmul %571, %572, %cst_175 {dimension_numbers = #tpu.dot_dimension_numbers<[1], [0], [0], [1], [0, 0, 1, 1], [], []>} : vector<16x64xf32>, vector<64x32xf32>, vector<16x32xf32> -> vector<16x32xf32>
    %c0_176 = arith.constant 0 : index
    %c0_177 = arith.constant 0 : index
    %574 = vector.load %arg7[%c0_176, %c0_177] : memref<1x32xf32, #tpu.memory_space<vmem>>, vector<1x32xf32>
    %575 = vector.broadcast %574 : vector<1x32xf32> to vector<16x32xf32>
    %576 = arith.addf %573, %575 : vector<16x32xf32>
    %577 = math.tanh %576 : vector<16x32xf32>
    %578 = vector.shape_cast %577 : vector<16x32xf32> to vector<8x2x32xf32>
    %c0_178 = arith.constant 0 : index
    %c0_179 = arith.constant 0 : index
    %c0_180 = arith.constant 0 : index
    %579 = vector.load %arg8[%c0_178, %c0_179, %c0_180] : memref<8x2x32xf32, #tpu.memory_space<vmem>>, vector<8x2x32xf32>
    tpu.vector_store %arg8[%c0_178, %c0_179, %c0_180], %578 {strides = array<i32>} : memref<8x2x32xf32, #tpu.memory_space<vmem>>, vector<8x2x32xf32>,
    return
  }
}

</mosaic_0001>

<llo_original>
// kernel: encoder_forward.1
$region0: #{encoder_forward.1}
  #allocation0 [shape = 'u32[]', space=smem, size = 0x4, offset = 0x4, fixed_abs, tag = 'smem constant byte address 0x4 - core index']
  #allocation1 [shape = 'u32[144,128]{1,0:T(1,128)}', space=vmem, size = 0x12000, scoped, tag = 'internal scratch']
  #allocation2 [shape = 'f32[8,2,192]{2,1,0:T(2,128)}', space=vmem, size = 0x4000, scoped, tag = 'scratch operand']
  #allocation3 [shape = 'f32[8,2,32]{2,1,0:T(2,128)}', space=vmem, size = 0x2000, scoped, tag = 'scratch operand']
  #allocation4 [shape = 'f32[8,2,32]{2,1,0:T(2,128)}', space=vmem, size = 0x2000, scoped, tag = 'scratch operand']
  %s0 = inlined_call_operand.vmem [shape: f32[8,2,48], index: 0, kind: input, shape index: {}]
  %s1 = inlined_call_operand.vmem [shape: f32[2,48], index: 1, kind: input, shape index: {}]
  %s2 = inlined_call_operand.vmem [shape: f32[48,192], index: 2, kind: input, shape index: {}]
  %s3 = inlined_call_operand.vmem [shape: f32[1,192], index: 3, kind: input, shape index: {}]
  %s4 = inlined_call_operand.vmem [shape: f32[64,192], index: 4, kind: input, shape index: {}]
  %s5 = inlined_call_operand.vmem [shape: f32[1,192], index: 5, kind: input, shape index: {}]
  %s6 = inlined_call_operand.vmem [shape: f32[64,32], index: 6, kind: input, shape index: {}]
  %s7 = inlined_call_operand.vmem [shape: f32[1,32], index: 7, kind: input, shape index: {}]
  %s8 = inlined_call_operand.hbm [shape: f32[8,2,32], index: 8, kind: output, shape index: {0}]
  %s9 = inlined_call_operand.hbm [shape: f32[2,2,32], index: 9, kind: output, shape index: {1}]
  %10 = xla_tuple %s8, %s9
  %s11 = sld [smem:[#allocation0]]
  $region50: #{encoder_forward.1} parent=0
    _
  %s13 = ssub.s32 1, %s11
  %s14 = scalar_select 0, %s13, %s11
  $region1: #{encoder_forward.1} parent=0
    #allocation5 [shape = 'u8[8192]{0}', space=vmem, size = 0x2000, scoped, tag = 'output window, operand 0, single buffered']
    #allocation6 [shape = 's32[1]{0}', space=sflag, size = 0x4, scoped, tag = 'scoped memory for encoder_forward.1']
    #allocation7 [shape = 'u8[2048]{0}', space=vmem, size = 0x800, scoped, tag = 'output window, operand 1, single buffered']
    #allocation8 [shape = 's32[1]{0}', space=sflag, size = 0x4, scoped, tag = 'scoped memory for encoder_forward.1']
    %15 = vsyncpa [#allocation6], 0
    %16 = vsyncpa [#allocation8], 0
    // Predicated region
    $region2: #{encoder_forward.1} parent=1 // pred_check
      _
    $region3: #{encoder_forward.1} parent=1 // pred_check_branch
      %18 = sbr.rel (0) target = $region5
    $region4: #{encoder_forward.1} parent=1 // pred_region
      _
    $region5: #{encoder_forward.1} parent=1 // pred_fallthru
      _
    // Predicated region
    $region6: #{encoder_forward.1} parent=1 // pred_check
      _
    $region7: #{encoder_forward.1} parent=1 // pred_check_branch
      %20 = sbr.rel (0) target = $region9
    $region8: #{encoder_forward.1} parent=1 // pred_region
      _
    $region9: #{encoder_forward.1} parent=1 // pred_fallthru
      _
    // Predicated region
    $region10: #{encoder_forward.1} parent=1 // pred_check
      _
    $region11: #{encoder_forward.1} parent=1 // pred_check_branch
      %22 = sbr.rel (0) target = $region13
    $region12: #{encoder_forward.1} parent=1 // pred_region
      _
    $region13: #{encoder_forward.1} parent=1 // pred_fallthru
      _
    // Predicated region
    $region14: #{encoder_forward.1} parent=1 // pred_check
      _
    $region15: #{encoder_forward.1} parent=1 // pred_check_branch
      %24 = sbr.rel (0) target = $region17
    $region16: #{encoder_forward.1} parent=1 // pred_region
      _
    $region17: #{encoder_forward.1} parent=1 // pred_fallthru
      _
    // Predicated region
    $region18: #{encoder_forward.1} parent=1 // pred_check
      _
    $region19: #{encoder_forward.1} parent=1 // pred_check_branch
      %26 = sbr.rel (0) target = $region21
    $region20: #{encoder_forward.1} parent=1 // pred_region
      _
    $region21: #{encoder_forward.1} parent=1 // pred_fallthru
      _
    // Predicated region
    $region22: #{encoder_forward.1} parent=1 // pred_check
      _
    $region23: #{encoder_forward.1} parent=1 // pred_check_branch
      %28 = sbr.rel (0) target = $region25
    $region24: #{encoder_forward.1} parent=1 // pred_region
      _
    $region25: #{encoder_forward.1} parent=1 // pred_fallthru
      _
    // Predicated region
    $region26: #{encoder_forward.1} parent=1 // pred_check
      _
    $region27: #{encoder_forward.1} parent=1 // pred_check_branch
      %30 = sbr.rel (0) target = $region29
    $region28: #{encoder_forward.1} parent=1 // pred_region
      _
    $region29: #{encoder_forward.1} parent=1 // pred_fallthru
      _
    // Predicated region
    $region30: #{encoder_forward.1} parent=1 // pred_check
      _
    $region31: #{encoder_forward.1} parent=1 // pred_check_branch
      %32 = sbr.rel (0) target = $region33
    $region32: #{encoder_forward.1} parent=1 // pred_region
      _
    $region33: #{encoder_forward.1} parent=1 // pred_fallthru
      _
    %v33 = vld [vmem:[%s0] sm:$0x3]
    %v34 = vld [vmem:[%s0 + $0x2] sm:$0x3]
    %v35 = vld [vmem:[%s0 + $0x4] sm:$0x3]
    %v36 = vld [vmem:[%s0 + $0x6] sm:$0x3]
    %v37 = vld [vmem:[%s0 + $0x8] sm:$0x3]
    %v38 = vld [vmem:[%s0 + $0xa] sm:$0x3]
    %v39 = vld [vmem:[%s0 + $0xc] sm:$0x3]
    %v40 = vld [vmem:[%s0 + $0xe] sm:$0x3]
    %v41 = vld [vmem:[%s1] sm:$0x3]
    %v42 = vmul.f32 %v33, %v41
    %v43 = vmul.f32 %v34, %v41
    %v44 = vmul.f32 %v35, %v41
    %v45 = vmul.f32 %v36, %v41
    %v46 = vmul.f32 %v37, %v41
    %v47 = vmul.f32 %v38, %v41
    %v48 = vmul.f32 %v39, %v41
    %v49 = vmul.f32 %v40, %v41
    %v50 = vld [vmem:[%s2] sm:$0xff]
    %v51 = vld [vmem:[%s2 + $0x8] sm:$0xff]
    %v52 = vld [vmem:[%s2 + $0x10] sm:$0xff]
    %v53 = vld [vmem:[%s2 + $0x18] sm:$0xff]
    %v54 = vld [vmem:[%s2 + $0x20] sm:$0xff]
    %v55 = vld [vmem:[%s2 + $0x28] sm:$0xff]
    %v56 = vld [vmem:[%s2 + $0x30] sm:$0xff]
    %v57 = vld [vmem:[%s2 + $0x38] sm:$0xff]
    %v58 = vld [vmem:[%s2 + $0x40] sm:$0xff]
    %v59 = vld [vmem:[%s2 + $0x48] sm:$0xff]
    %v60 = vld [vmem:[%s2 + $0x50] sm:$0xff]
    %v61 = vld [vmem:[%s2 + $0x58] sm:$0xff]
    %v62 = vld [vmem:[%s3] sm:$0x3]
    %v64 = vlaneseq
    %v65 = vshrl.u32 %v64, 7
    %v66 = vsub.s32 0, %v65
    %v67 = vrot.slane %v62, %v66
    %v68 = vlaneseq
    %v69 = vshrl.u32 %v68, 7
    %v70 = vsub.s32 1, %v69
    %v71 = vrot.slane %v62, %v70
    %v82 = vcombine.low %v42, %v43
    %v83 = vcombine.low %v44, %v45
    %v85 = vunpack.c.l.s4 1983009808
    %v86 = vunpack.c.0.s8 %v85
    %v87 = vlaneseq
    %v88 = vshrl.u32 %v87, 7
    %v89 = vsub.s32 %v86, %v88
    %v90 = vrot.slane %v82, %v89
    %v92 = vunpack.c.l.s4 1983009808
    %v93 = vunpack.c.0.s8 %v92
    %v94 = vlaneseq
    %v95 = vshrl.u32 %v94, 7
    %v96 = vsub.s32 %v93, %v95
    %v97 = vrot.slane %v83, %v96
    %v98 = vcombine.low %v90, %v97
    %v99 = vcombine.low %v46, %v47
    %v100 = vcombine.low %v48, %v49
    %v102 = vunpack.c.l.s4 1983009808
    %v103 = vunpack.c.0.s8 %v102
    %v104 = vlaneseq
    %v105 = vshrl.u32 %v104, 7
    %v106 = vsub.s32 %v103, %v105
    %v107 = vrot.slane %v99, %v106
    %v109 = vunpack.c.l.s4 1983009808
    %v110 = vunpack.c.0.s8 %v109
    %v111 = vlaneseq
    %v112 = vshrl.u32 %v111, 7
    %v113 = vsub.s32 %v110, %v112
    %v114 = vrot.slane %v100, %v113
    %v115 = vcombine.low %v107, %v114
    %vm116 = vcmask 392192
    %v117 = vsel %vm116, %v98, 0
    %v119 = vsel %vm116, %v115, 0
    %121 = vmatprep.subr.mxu0 %v51
    %122 = vmatpush1.msra.mxu0 %v50
    %123 = vmatprep.subr.mxu0 %v53
    %124 = vmatpush1.msra.mxu0 %v52
    %125 = vmatprep.subr.mxu0 %v55
    %126 = vmatpush1.msra.mxu0 %v54
    %127 = vmatprep.subr.mxu0 %v57
    %128 = vmatpush1.msra.mxu0 %v56
    %129 = vmatprep.subr.mxu0 %v59
    %130 = vmatpush1.msra.mxu0 %v58
    %131 = vmatprep.subr.mxu0 %v61
    %132 = vmatpush1.msra.mxu0 %v60
    %133 = vmatprep.subr.mxu0 0.0
    %134 = vmatpush1.msra.mxu0 0.0
    %135 = vmatprep.subr.mxu0 0.0
    %136 = vmatpush1.msra.mxu0 0.0
    %137 = vmatprep.subr.mxu0 0.0
    %138 = vmatpush1.msra.mxu0 0.0
    %139 = vmatprep.subr.mxu0 0.0
    %140 = vmatpush1.msra.mxu0 0.0
    %141 = vmatprep.subr.mxu0 0.0
    %142 = vmatpush1.msra.mxu0 0.0
    %143 = vmatprep.subr.mxu0 0.0
    %144 = vmatpush1.msra.mxu0 0.0
    %145 = vmatprep.subr.mxu0 0.0
    %146 = vmatpush1.msra.mxu0 0.0
    %147 = vmatprep.subr.mxu0 0.0
    %148 = vmatpush1.msra.mxu0 0.0
    %149 = vmatprep.subr.mxu0 0.0
    %150 = vmatpush1.msra.mxu0 0.0
    %151 = vmatprep.subr.mxu0 0.0
    %152 = vmatpush1.msra.mxu0 0.0
    %153 = vmatprep.subr.mxu0 0.0
    %154 = vmatpush1.msra.mxu0 0.0
    %155 = vmatprep.subr.mxu0 0.0
    %156 = vmatpush1.msra.mxu0 0.0
    %157 = vmatprep.subr.mxu0 0.0
    %158 = vmatpush1.msra.mxu0 0.0
    %159 = vmatprep.subr.mxu0 0.0
    %160 = vmatpush1.msra.mxu0 0.0
    %161 = vmatprep.subr.mxu0 0.0
    %162 = vmatpush1.msra.mxu0 0.0
    %163 = vmatprep.subr.mxu0 0.0
    %164 = vmatpush1.msra.mxu0 0.0
    %165 = vmatprep.subr.mxu0 0.0
    %166 = vmatpush1.msra.mxu0 0.0
    %167 = vmatprep.subr.mxu0 0.0
    %168 = vmatpush1.msra.mxu0 0.0
    %169 = vmatprep.subr.mxu0 0.0
    %170 = vmatpush1.msra.mxu0 0.0
    %171 = vmatprep.subr.mxu0 0.0
    %172 = vmatpush1.msra.mxu0 0.0
    %173 = vmatprep.subr.mxu0 0.0
    %174 = vmatpush1.msra.mxu0 0.0
    %175 = vmatprep.subr.mxu0 0.0
    %176 = vmatpush1.msra.mxu0 0.0
    %177 = vmatprep.subr.mxu0 0.0
    %178 = vmatpush1.msra.mxu0 0.0
    %179 = vmatprep.subr.mxu0 0.0
    %180 = vmatpush1.msra.mxu0 0.0
    %181 = vmatprep.subr.mxu0 0.0
    %182 = vmatpush1.msra.mxu0 0.0
    %183 = vmatprep.subr.mxu0 0.0
    %184 = vmatpush1.msra.mxu0 0.0
    %185 = vmatprep.mubr.f32.mxu0 0.0
    %186 = vmatmul.mubr.f32.gmra.mrb[0].mxu0 %v117
    %v187 = vpop.f32.mrb[0].mxu0
    %v188 = vadd.f32 %v67, %v187
    %v189 = vpop.f32.mrb[0].mxu0
    %v190 = vadd.f32 %v71, %v189
    %191 = vmatprep.mubr.f32.mxu0 0.0
    %192 = vmatmul.mubr.f32.gmra.mrb[0].mxu0 %v119
    %v193 = vpop.f32.mrb[0].mxu0
    %v194 = vadd.f32 %v67, %v193
    %v195 = vpop.f32.mrb[0].mxu0
    %v196 = vadd.f32 %v71, %v195
    %197 = vdwg.mxu0
    %v202 = vcombine.low %v188, %v190
    %v203 = vcombine.high %v188, %v190
    %v205 = vunpack.c.l.s4 1983009808
    %v206 = vunpack.c.0.s8 %v205
    %v207 = vlaneseq
    %v208 = vshrl.u32 %v207, 7
    %v209 = vsub.s32 %v206, %v208
    %v210 = vrot.slane %v202, %v209
    %v212 = vunpack.c.l.s4 1983009808
    %v213 = vunpack.c.0.s8 %v212
    %v214 = vlaneseq
    %v215 = vshrl.u32 %v214, 7
    %v216 = vsub.s32 %v213, %v215
    %v217 = vrot.slane %v203, %v216
    %v218 = vcombine.high %v210, %v210
    %v219 = vcombine.high %v217, %v217
    %v220 = vcombine.low %v194, %v196
    %v221 = vcombine.high %v194, %v196
    %v223 = vunpack.c.l.s4 1983009808
    %v224 = vunpack.c.0.s8 %v223
    %v225 = vlaneseq
    %v226 = vshrl.u32 %v225, 7
    %v227 = vsub.s32 %v224, %v226
    %v228 = vrot.slane %v220, %v227
    %v230 = vunpack.c.l.s4 1983009808
    %v231 = vunpack.c.0.s8 %v230
    %v232 = vlaneseq
    %v233 = vshrl.u32 %v232, 7
    %v234 = vsub.s32 %v231, %v233
    %v235 = vrot.slane %v221, %v234
    %v236 = vcombine.high %v228, %v228
    %v237 = vcombine.high %v235, %v235
    %vm246 = vcmask 1041408
    %vm247 = vcmask 519170
    %vm248 = vmor %vm247, %vm246
    %249 = vst.msk [vmem:[#allocation2] sm:$0xf] %vm248, %v210
    %250 = vst.msk [vmem:[#allocation2 + $0x4] sm:$0xf] %vm248, %v218
    %251 = vst.msk [vmem:[#allocation2 + $0x8] sm:$0xf] %vm248, %v217
    %252 = vst.msk [vmem:[#allocation2 + $0xc] sm:$0xf] %vm248, %v219
    %253 = vst.msk [vmem:[#allocation2 + $0x10] sm:$0xf] %vm248, %v228
    %254 = vst.msk [vmem:[#allocation2 + $0x14] sm:$0xf] %vm248, %v236
    %255 = vst.msk [vmem:[#allocation2 + $0x18] sm:$0xf] %vm248, %v235
    %256 = vst.msk [vmem:[#allocation2 + $0x1c] sm:$0xf] %vm248, %v237
    %v257 = vld [vmem:[%s4] sm:$0xff]
    %v258 = vld [vmem:[%s4 + $0x8] sm:$0xff]
    %v259 = vld [vmem:[%s4 + $0x10] sm:$0xff]
    %v260 = vld [vmem:[%s4 + $0x18] sm:$0xff]
    %v261 = vld [vmem:[%s4 + $0x20] sm:$0xff]
    %v262 = vld [vmem:[%s4 + $0x28] sm:$0xff]
    %v263 = vld [vmem:[%s4 + $0x30] sm:$0xff]
    %v264 = vld [vmem:[%s4 + $0x38] sm:$0xff]
    %v265 = vld [vmem:[%s4 + $0x40] sm:$0xff]
    %v266 = vld [vmem:[%s4 + $0x48] sm:$0xff]
    %v267 = vld [vmem:[%s4 + $0x50] sm:$0xff]
    %v268 = vld [vmem:[%s4 + $0x58] sm:$0xff]
    %v269 = vld [vmem:[%s4 + $0x60] sm:$0xff]
    %v270 = vld [vmem:[%s4 + $0x68] sm:$0xff]
    %v271 = vld [vmem:[%s4 + $0x70] sm:$0xff]
    %v272 = vld [vmem:[%s4 + $0x78] sm:$0xff]
    %v273 = vld [vmem:[%s5] sm:$0x3]
    %v275 = vlaneseq
    %v276 = vshrl.u32 %v275, 7
    %v277 = vsub.s32 0, %v276
    %v278 = vrot.slane %v273, %v277
    %v279 = vlaneseq
    %v280 = vshrl.u32 %v279, 7
    %v281 = vsub.s32 1, %v280
    %v282 = vrot.slane %v273, %v281
    %vm285 = vcmask 523264
    %v287 = vsel %vm285, 0.0, 0
    %289 = vmatprep.subr.mxu0 %v258
    %290 = vmatpush1.msra.mxu0 %v257
    %291 = vmatprep.subr.mxu0 %v260
    %292 = vmatpush1.msra.mxu0 %v259
    %293 = vmatprep.subr.mxu0 %v262
    %294 = vmatpush1.msra.mxu0 %v261
    %295 = vmatprep.subr.mxu0 %v264
    %296 = vmatpush1.msra.mxu0 %v263
    %297 = vmatprep.subr.mxu0 %v266
    %298 = vmatpush1.msra.mxu0 %v265
    %299 = vmatprep.subr.mxu0 %v268
    %300 = vmatpush1.msra.mxu0 %v267
    %301 = vmatprep.subr.mxu0 %v270
    %302 = vmatpush1.msra.mxu0 %v269
    %303 = vmatprep.subr.mxu0 %v272
    %304 = vmatpush1.msra.mxu0 %v271
    %305 = vmatprep.subr.mxu0 0.0
    %306 = vmatpush1.msra.mxu0 0.0
    %307 = vmatprep.subr.mxu0 0.0
    %308 = vmatpush1.msra.mxu0 0.0
    %309 = vmatprep.subr.mxu0 0.0
    %310 = vmatpush1.msra.mxu0 0.0
    %311 = vmatprep.subr.mxu0 0.0
    %312 = vmatpush1.msra.mxu0 0.0
    %313 = vmatprep.subr.mxu0 0.0
    %314 = vmatpush1.msra.mxu0 0.0
    %315 = vmatprep.subr.mxu0 0.0
    %316 = vmatpush1.msra.mxu0 0.0
    %317 = vmatprep.subr.mxu0 0.0
    %318 = vmatpush1.msra.mxu0 0.0
    %319 = vmatprep.subr.mxu0 0.0
    %320 = vmatpush1.msra.mxu0 0.0
    %321 = vmatprep.subr.mxu0 0.0
    %322 = vmatpush1.msra.mxu0 0.0
    %323 = vmatprep.subr.mxu0 0.0
    %324 = vmatpush1.msra.mxu0 0.0
    %325 = vmatprep.subr.mxu0 0.0
    %326 = vmatpush1.msra.mxu0 0.0
    %327 = vmatprep.subr.mxu0 0.0
    %328 = vmatpush1.msra.mxu0 0.0
    %329 = vmatprep.subr.mxu0 0.0
    %330 = vmatpush1.msra.mxu0 0.0
    %331 = vmatprep.subr.mxu0 0.0
    %332 = vmatpush1.msra.mxu0 0.0
    %333 = vmatprep.subr.mxu0 0.0
    %334 = vmatpush1.msra.mxu0 0.0
    %335 = vmatprep.subr.mxu0 0.0
    %336 = vmatpush1.msra.mxu0 0.0
    %337 = vmatprep.subr.mxu0 0.0
    %338 = vmatpush1.msra.mxu0 0.0
    %339 = vmatprep.subr.mxu0 0.0
    %340 = vmatpush1.msra.mxu0 0.0
    %341 = vmatprep.subr.mxu0 0.0
    %342 = vmatpush1.msra.mxu0 0.0
    %343 = vmatprep.subr.mxu0 0.0
    %344 = vmatpush1.msra.mxu0 0.0
    %345 = vmatprep.subr.mxu0 0.0
    %346 = vmatpush1.msra.mxu0 0.0
    %347 = vmatprep.subr.mxu0 0.0
    %348 = vmatpush1.msra.mxu0 0.0
    %349 = vmatprep.subr.mxu0 0.0
    %350 = vmatpush1.msra.mxu0 0.0
    %351 = vmatprep.subr.mxu0 0.0
    %352 = vmatpush1.msra.mxu0 0.0
    %353 = vmatprep.mubr.f32.mxu0 0.0
    %354 = vmatmul.mubr.f32.gmra.mrb[0].mxu0 %v287
    %v355 = vpop.f32.mrb[0].mxu0
    %v356 = vadd.f32 %v278, %v355
    %v357 = vpop.f32.mrb[0].mxu0
    %v358 = vadd.f32 %v282, %v357
    %359 = vdwg.mxu0
    %v360 = vld [vmem:[#allocation2] sm:$0xf]
    %s361 = scalar_lea.vmem [#allocation2], 28
    %v362 = vld [vmem:[%s361] sm:$0xf]
    %v363 = vadd.f32 %v360, %v356
    %v364 = vxor.u32 %v363, 2147483648
    %v365 = vmul.f32 %v364, 1.442695
    %v366 = vpow.pop %v365
    %v367 = vadd.f32 %v366, 1.0
    %v368 = vrcp.pop %v367
    %v369 = vmul.f32 1.0, %v368
    %v372 = vunpack.c.l.s4 1983009808
    %v373 = vunpack.c.0.s8 %v372
    %v374 = vlaneseq
    %v375 = vshrl.u32 %v374, 7
    %v376 = vsub.s32 %v373, %v375
    %v377 = vrot.slane %v356, %v376
    %378 = vrot.lane.b32.xlu0 %v377, 64
    %v379 = vpop.permute.xlu0 %378
    %v381 = vmul.f32 %v369, %v379
    %383 = vrot.lane.b32.xlu0 %v381, 64
    %v384 = vpop.permute.xlu0 %383
    %v386 = vadd.f32 %v360, %v384
    %v387 = vtanh.pop %v386
    %v388 = vsub.f32 1.0, %v369
    %390 = vrot.lane.b32.xlu0 %v387, 96
    %v391 = vpop.permute.xlu0 %390
    %v393 = vmul.f32 %v388, %v391
    %v394 = vmul.f32 %v369, 0.0
    %v395 = vadd.f32 %v393, %v394
    %v396 = vadd.f32 %v362, %v356
    %v397 = vxor.u32 %v396, 2147483648
    %v398 = vmul.f32 %v397, 1.442695
    %v399 = vpow.pop %v398
    %v400 = vadd.f32 %v399, 1.0
    %v401 = vrcp.pop %v400
    %v402 = vmul.f32 1.0, %v401
    %v404 = vrot.slane %v362, 2
    %v406 = vadd.f32 %v404, %v358
    %v407 = vxor.u32 %v406, 2147483648
    %v408 = vmul.f32 %v407, 1.442695
    %v409 = vpow.pop %v408
    %v410 = vadd.f32 %v409, 1.0
    %v411 = vrcp.pop %v410
    %v412 = vmul.f32 1.0, %v411
    %v415 = vunpack.c.l.s4 1983009808
    %v416 = vunpack.c.0.s8 %v415
    %v417 = vlaneseq
    %v418 = vshrl.u32 %v417, 7
    %v419 = vsub.s32 %v416, %v418
    %v420 = vrot.slane %v358, %v419
    %421 = vrot.lane.b32.xlu0 %v420, 64
    %v422 = vpop.permute.xlu0 %421
    %v424 = vmul.f32 %v402, %v422
    %425 = vrot.lane.b32.xlu0 %v362, 96
    %v426 = vpop.permute.xlu0 %425
    %v427 = vrot.slane %v426, 2
    %430 = vrot.lane.b32.xlu0 %v424, 32
    %v431 = vpop.permute.xlu0 %430
    %v433 = vadd.f32 %v427, %v431
    %v434 = vtanh.pop %v433
    %v435 = vsub.f32 1.0, %v412
    %v436 = vmul.f32 %v435, %v434
    %v437 = vmul.f32 %v412, 0.0
    %v438 = vadd.f32 %v436, %v437
    %v441 = vunpack.c.l.s4 1983009808
    %v442 = vunpack.c.0.s8 %v441
    %v443 = vlaneseq
    %v444 = vshrl.u32 %v443, 7
    %v445 = vsub.s32 %v442, %v444
    %v446 = vrot.slane %v395, %v445
    %447 = vrot.lane.b32.xlu0 %v446, 96
    %v448 = vpop.permute.xlu0 %447
    %vm450 = vcmask 254976
    %451 = vst.msk [vmem:[#allocation3] sm:$0x3] %vm450, %v448
    %s452 = scalar_lea.vmem [#allocation4], 14
    %453 = vst.msk [vmem:[%s452] sm:$0x3] %vm450, %v438
    %v456 = vunpack.c.l.s4 1983009808
    %v457 = vunpack.c.0.s8 %v456
    %v458 = vlaneseq
    %v459 = vshrl.u32 %v458, 7
    %v460 = vsub.s32 %v457, %v459
    %v461 = vrot.slane %v438, %v460
    %462 = vrot.lane.b32.xlu0 %v461, 32
    %v463 = vpop.permute.xlu0 %462
    %vm465 = vcmask 261120
    %v466 = vsel %vm465, %v448, %v463
    %v468 = vsel %vm285, %v466, 0
    %470 = vmatprep.subr.mxu0 %v258
    %471 = vmatpush1.msra.mxu0 %v257
    %472 = vmatprep.subr.mxu0 %v260
    %473 = vmatpush1.msra.mxu0 %v259
    %474 = vmatprep.subr.mxu0 %v262
    %475 = vmatpush1.msra.mxu0 %v261
    %476 = vmatprep.subr.mxu0 %v264
    %477 = vmatpush1.msra.mxu0 %v263
    %478 = vmatprep.subr.mxu0 %v266
    %479 = vmatpush1.msra.mxu0 %v265
    %480 = vmatprep.subr.mxu0 %v268
    %481 = vmatpush1.msra.mxu0 %v267
    %482 = vmatprep.subr.mxu0 %v270
    %483 = vmatpush1.msra.mxu0 %v269
    %484 = vmatprep.subr.mxu0 %v272
    %485 = vmatpush1.msra.mxu0 %v271
    %486 = vmatprep.subr.mxu0 0.0
    %487 = vmatpush1.msra.mxu0 0.0
    %488 = vmatprep.subr.mxu0 0.0
    %489 = vmatpush1.msra.mxu0 0.0
    %490 = vmatprep.subr.mxu0 0.0
    %491 = vmatpush1.msra.mxu0 0.0
    %492 = vmatprep.subr.mxu0 0.0
    %493 = vmatpush1.msra.mxu0 0.0
    %494 = vmatprep.subr.mxu0 0.0
    %495 = vmatpush1.msra.mxu0 0.0
    %496 = vmatprep.subr.mxu0 0.0
    %497 = vmatpush1.msra.mxu0 0.0
    %498 = vmatprep.subr.mxu0 0.0
    %499 = vmatpush1.msra.mxu0 0.0
    %500 = vmatprep.subr.mxu0 0.0
    %501 = vmatpush1.msra.mxu0 0.0
    %502 = vmatprep.subr.mxu0 0.0
    %503 = vmatpush1.msra.mxu0 0.0
    %504 = vmatprep.subr.mxu0 0.0
    %505 = vmatpush1.msra.mxu0 0.0
    %506 = vmatprep.subr.mxu0 0.0
    %507 = vmatpush1.msra.mxu0 0.0
    %508 = vmatprep.subr.mxu0 0.0
    %509 = vmatpush1.msra.mxu0 0.0
    %510 = vmatprep.subr.mxu0 0.0
    %511 = vmatpush1.msra.mxu0 0.0
    %512 = vmatprep.subr.mxu0 0.0
    %513 = vmatpush1.msra.mxu0 0.0
    %514 = vmatprep.subr.mxu0 0.0
    %515 = vmatpush1.msra.mxu0 0.0
    %516 = vmatprep.subr.mxu0 0.0
    %517 = vmatpush1.msra.mxu0 0.0
    %518 = vmatprep.subr.mxu0 0.0
    %519 = vmatpush1.msra.mxu0 0.0
    %520 = vmatprep.subr.mxu0 0.0
    %521 = vmatpush1.msra.mxu0 0.0
    %522 = vmatprep.subr.mxu0 0.0
    %523 = vmatpush1.msra.mxu0 0.0
    %524 = vmatprep.subr.mxu0 0.0
    %525 = vmatpush1.msra.mxu0 0.0
    %526 = vmatprep.subr.mxu0 0.0
    %527 = vmatpush1.msra.mxu0 0.0
    %528 = vmatprep.subr.mxu0 0.0
    %529 = vmatpush1.msra.mxu0 0.0
    %530 = vmatprep.subr.mxu0 0.0
    %531 = vmatpush1.msra.mxu0 0.0
    %532 = vmatprep.subr.mxu0 0.0
    %533 = vmatpush1.msra.mxu0 0.0
    %534 = vmatprep.mubr.f32.mxu0 0.0
    %535 = vmatmul.mubr.f32.gmra.mrb[0].mxu0 %v468
    %v536 = vpop.f32.mrb[0].mxu0
    %v537 = vadd.f32 %v278, %v536
    %v538 = vpop.f32.mrb[0].mxu0
    %v539 = vadd.f32 %v282, %v538
    %540 = vdwg.mxu0
    %s541 = scalar_lea.vmem [#allocation2], 4
    %v542 = vld [vmem:[%s541] sm:$0xf]
    %s543 = scalar_lea.vmem [#allocation2], 24
    %v544 = vld [vmem:[%s543] sm:$0xf]
    %v545 = vadd.f32 %v542, %v537
    %v546 = vxor.u32 %v545, 2147483648
    %v547 = vmul.f32 %v546, 1.442695
    %v548 = vpow.pop %v547
    %v549 = vadd.f32 %v548, 1.0
    %v550 = vrcp.pop %v549
    %v551 = vmul.f32 1.0, %v550
    %v554 = vunpack.c.l.s4 1983009808
    %v555 = vunpack.c.0.s8 %v554
    %v556 = vlaneseq
    %v557 = vshrl.u32 %v556, 7
    %v558 = vsub.s32 %v555, %v557
    %v559 = vrot.slane %v537, %v558
    %560 = vrot.lane.b32.xlu0 %v559, 64
    %v561 = vpop.permute.xlu0 %560
    %v563 = vmul.f32 %v551, %v561
    %565 = vrot.lane.b32.xlu0 %v563, 64
    %v566 = vpop.permute.xlu0 %565
    %v568 = vadd.f32 %v542, %v566
    %v569 = vtanh.pop %v568
    %v570 = vsub.f32 1.0, %v551
    %572 = vrot.lane.b32.xlu0 %v569, 96
    %v573 = vpop.permute.xlu0 %572
    %v575 = vmul.f32 %v570, %v573
    %v577 = vunpack.c.l.s4 1983009808
    %v578 = vunpack.c.0.s8 %v577
    %v579 = vlaneseq
    %v580 = vshrl.u32 %v579, 7
    %v581 = vsub.s32 %v578, %v580
    %v582 = vrot.slane %v466, %v581
    %583 = vrot.lane.b32.xlu0 %v582, 32
    %v584 = vpop.permute.xlu0 %583
    %v586 = vmul.f32 %v551, %v584
    %v587 = vadd.f32 %v575, %v586
    %v588 = vadd.f32 %v544, %v537
    %v589 = vxor.u32 %v588, 2147483648
    %v590 = vmul.f32 %v589, 1.442695
    %v591 = vpow.pop %v590
    %v592 = vadd.f32 %v591, 1.0
    %v593 = vrcp.pop %v592
    %v594 = vmul.f32 1.0, %v593
    %v596 = vrot.slane %v544, 2
    %v598 = vadd.f32 %v596, %v539
    %v599 = vxor.u32 %v598, 2147483648
    %v600 = vmul.f32 %v599, 1.442695
    %v601 = vpow.pop %v600
    %v602 = vadd.f32 %v601, 1.0
    %v603 = vrcp.pop %v602
    %v604 = vmul.f32 1.0, %v603
    %v607 = vunpack.c.l.s4 1983009808
    %v608 = vunpack.c.0.s8 %v607
    %v609 = vlaneseq
    %v610 = vshrl.u32 %v609, 7
    %v611 = vsub.s32 %v608, %v610
    %v612 = vrot.slane %v539, %v611
    %613 = vrot.lane.b32.xlu0 %v612, 64
    %v614 = vpop.permute.xlu0 %613
    %v616 = vmul.f32 %v594, %v614
    %617 = vrot.lane.b32.xlu0 %v544, 96
    %v618 = vpop.permute.xlu0 %617
    %v619 = vrot.slane %v618, 2
    %622 = vrot.lane.b32.xlu0 %v616, 32
    %v623 = vpop.permute.xlu0 %622
    %v625 = vadd.f32 %v619, %v623
    %v626 = vtanh.pop %v625
    %v627 = vsub.f32 1.0, %v604
    %v628 = vmul.f32 %v627, %v626
    %629 = vrot.lane.b32.xlu0 %v582, 96
    %v630 = vpop.permute.xlu0 %629
    %v632 = vmul.f32 %v604, %v630
    %v633 = vadd.f32 %v628, %v632
    %v636 = vunpack.c.l.s4 1983009808
    %v637 = vunpack.c.0.s8 %v636
    %v638 = vlaneseq
    %v639 = vshrl.u32 %v638, 7
    %v640 = vsub.s32 %v637, %v639
    %v641 = vrot.slane %v587, %v640
    %642 = vrot.lane.b32.xlu0 %v641, 96
    %v643 = vpop.permute.xlu0 %642
    %s645 = scalar_lea.vmem [#allocation3], 2
    %646 = vst.msk [vmem:[%s645] sm:$0x3] %vm450, %v643
    %s647 = scalar_lea.vmem [#allocation4], 12
    %648 = vst.msk [vmem:[%s647] sm:$0x3] %vm450, %v633
    %v651 = vunpack.c.l.s4 1983009808
    %v652 = vunpack.c.0.s8 %v651
    %v653 = vlaneseq
    %v654 = vshrl.u32 %v653, 7
    %v655 = vsub.s32 %v652, %v654
    %v656 = vrot.slane %v633, %v655
    %657 = vrot.lane.b32.xlu0 %v656, 32
    %v658 = vpop.permute.xlu0 %657
    %v660 = vsel %vm465, %v643, %v658
    %v662 = vsel %vm285, %v660, 0
    %664 = vmatprep.subr.mxu0 %v258
    %665 = vmatpush1.msra.mxu0 %v257
    %666 = vmatprep.subr.mxu0 %v260
    %667 = vmatpush1.msra.mxu0 %v259
    %668 = vmatprep.subr.mxu0 %v262
    %669 = vmatpush1.msra.mxu0 %v261
    %670 = vmatprep.subr.mxu0 %v264
    %671 = vmatpush1.msra.mxu0 %v263
    %672 = vmatprep.subr.mxu0 %v266
    %673 = vmatpush1.msra.mxu0 %v265
    %674 = vmatprep.subr.mxu0 %v268
    %675 = vmatpush1.msra.mxu0 %v267
    %676 = vmatprep.subr.mxu0 %v270
    %677 = vmatpush1.msra.mxu0 %v269
    %678 = vmatprep.subr.mxu0 %v272
    %679 = vmatpush1.msra.mxu0 %v271
    %680 = vmatprep.subr.mxu0 0.0
    %681 = vmatpush1.msra.mxu0 0.0
    %682 = vmatprep.subr.mxu0 0.0
    %683 = vmatpush1.msra.mxu0 0.0
    %684 = vmatprep.subr.mxu0 0.0
    %685 = vmatpush1.msra.mxu0 0.0
    %686 = vmatprep.subr.mxu0 0.0
    %687 = vmatpush1.msra.mxu0 0.0
    %688 = vmatprep.subr.mxu0 0.0
    %689 = vmatpush1.msra.mxu0 0.0
    %690 = vmatprep.subr.mxu0 0.0
    %691 = vmatpush1.msra.mxu0 0.0
    %692 = vmatprep.subr.mxu0 0.0
    %693 = vmatpush1.msra.mxu0 0.0
    %694 = vmatprep.subr.mxu0 0.0
    %695 = vmatpush1.msra.mxu0 0.0
    %696 = vmatprep.subr.mxu0 0.0
    %697 = vmatpush1.msra.mxu0 0.0
    %698 = vmatprep.subr.mxu0 0.0
    %699 = vmatpush1.msra.mxu0 0.0
    %700 = vmatprep.subr.mxu0 0.0
    %701 = vmatpush1.msra.mxu0 0.0
    %702 = vmatprep.subr.mxu0 0.0
    %703 = vmatpush1.msra.mxu0 0.0
    %704 = vmatprep.subr.mxu0 0.0
    %705 = vmatpush1.msra.mxu0 0.0
    %706 = vmatprep.subr.mxu0 0.0
    %707 = vmatpush1.msra.mxu0 0.0
    %708 = vmatprep.subr.mxu0 0.0
    %709 = vmatpush1.msra.mxu0 0.0
    %710 = vmatprep.subr.mxu0 0.0
    %711 = vmatpush1.msra.mxu0 0.0
    %712 = vmatprep.subr.mxu0 0.0
    %713 = vmatpush1.msra.mxu0 0.0
    %714 = vmatprep.subr.mxu0 0.0
    %715 = vmatpush1.msra.mxu0 0.0
    %716 = vmatprep.subr.mxu0 0.0
    %717 = vmatpush1.msra.mxu0 0.0
    %718 = vmatprep.subr.mxu0 0.0
    %719 = vmatpush1.msra.mxu0 0.0
    %720 = vmatprep.subr.mxu0 0.0
    %721 = vmatpush1.msra.mxu0 0.0
    %722 = vmatprep.subr.mxu0 0.0
    %723 = vmatpush1.msra.mxu0 0.0
    %724 = vmatprep.subr.mxu0 0.0
    %725 = vmatpush1.msra.mxu0 0.0
    %726 = vmatprep.subr.mxu0 0.0
    %727 = vmatpush1.msra.mxu0 0.0
    %728 = vmatprep.mubr.f32.mxu0 0.0
    %729 = vmatmul.mubr.f32.gmra.mrb[0].mxu0 %v662
    %v730 = vpop.f32.mrb[0].mxu0
    %v731 = vadd.f32 %v278, %v730
    %v732 = vpop.f32.mrb[0].mxu0
    %v733 = vadd.f32 %v282, %v732
    %734 = vdwg.mxu0
    %s735 = scalar_lea.vmem [#allocation2], 8
    %v736 = vld [vmem:[%s735] sm:$0xf]
    %s737 = scalar_lea.vmem [#allocation2], 20
    %v738 = vld [vmem:[%s737] sm:$0xf]
    %v739 = vadd.f32 %v736, %v731
    %v740 = vxor.u32 %v739, 2147483648
    %v741 = vmul.f32 %v740, 1.442695
    %v742 = vpow.pop %v741
    %v743 = vadd.f32 %v742, 1.0
    %v744 = vrcp.pop %v743
    %v745 = vmul.f32 1.0, %v744
    %v748 = vunpack.c.l.s4 1983009808
    %v749 = vunpack.c.0.s8 %v748
    %v750 = vlaneseq
    %v751 = vshrl.u32 %v750, 7
    %v752 = vsub.s32 %v749, %v751
    %v753 = vrot.slane %v731, %v752
    %754 = vrot.lane.b32.xlu0 %v753, 64
    %v755 = vpop.permute.xlu0 %754
    %v757 = vmul.f32 %v745, %v755
    %759 = vrot.lane.b32.xlu0 %v757, 64
    %v760 = vpop.permute.xlu0 %759
    %v762 = vadd.f32 %v736, %v760
    %v763 = vtanh.pop %v762
    %v764 = vsub.f32 1.0, %v745
    %766 = vrot.lane.b32.xlu0 %v763, 96
    %v767 = vpop.permute.xlu0 %766
    %v769 = vmul.f32 %v764, %v767
    %v771 = vunpack.c.l.s4 1983009808
    %v772 = vunpack.c.0.s8 %v771
    %v773 = vlaneseq
    %v774 = vshrl.u32 %v773, 7
    %v775 = vsub.s32 %v772, %v774
    %v776 = vrot.slane %v660, %v775
    %777 = vrot.lane.b32.xlu0 %v776, 32
    %v778 = vpop.permute.xlu0 %777
    %v780 = vmul.f32 %v745, %v778
    %v781 = vadd.f32 %v769, %v780
    %v782 = vadd.f32 %v738, %v731
    %v783 = vxor.u32 %v782, 2147483648
    %v784 = vmul.f32 %v783, 1.442695
    %v785 = vpow.pop %v784
    %v786 = vadd.f32 %v785, 1.0
    %v787 = vrcp.pop %v786
    %v788 = vmul.f32 1.0, %v787
    %v790 = vrot.slane %v738, 2
    %v792 = vadd.f32 %v790, %v733
    %v793 = vxor.u32 %v792, 2147483648
    %v794 = vmul.f32 %v793, 1.442695
    %v795 = vpow.pop %v794
    %v796 = vadd.f32 %v795, 1.0
    %v797 = vrcp.pop %v796
    %v798 = vmul.f32 1.0, %v797
    %v801 = vunpack.c.l.s4 1983009808
    %v802 = vunpack.c.0.s8 %v801
    %v803 = vlaneseq
    %v804 = vshrl.u32 %v803, 7
    %v805 = vsub.s32 %v802, %v804
    %v806 = vrot.slane %v733, %v805
    %807 = vrot.lane.b32.xlu0 %v806, 64
    %v808 = vpop.permute.xlu0 %807
    %v810 = vmul.f32 %v788, %v808
    %811 = vrot.lane.b32.xlu0 %v738, 96
    %v812 = vpop.permute.xlu0 %811
    %v813 = vrot.slane %v812, 2
    %816 = vrot.lane.b32.xlu0 %v810, 32
    %v817 = vpop.permute.xlu0 %816
    %v819 = vadd.f32 %v813, %v817
    %v820 = vtanh.pop %v819
    %v821 = vsub.f32 1.0, %v798
    %v822 = vmul.f32 %v821, %v820
    %823 = vrot.lane.b32.xlu0 %v776, 96
    %v824 = vpop.permute.xlu0 %823
    %v826 = vmul.f32 %v798, %v824
    %v827 = vadd.f32 %v822, %v826
    %v830 = vunpack.c.l.s4 1983009808
    %v831 = vunpack.c.0.s8 %v830
    %v832 = vlaneseq
    %v833 = vshrl.u32 %v832, 7
    %v834 = vsub.s32 %v831, %v833
    %v835 = vrot.slane %v781, %v834
    %836 = vrot.lane.b32.xlu0 %v835, 96
    %v837 = vpop.permute.xlu0 %836
    %s839 = scalar_lea.vmem [#allocation3], 4
    %840 = vst.msk [vmem:[%s839] sm:$0x3] %vm450, %v837
    %s841 = scalar_lea.vmem [#allocation4], 10
    %842 = vst.msk [vmem:[%s841] sm:$0x3] %vm450, %v827
    %v845 = vunpack.c.l.s4 1983009808
    %v846 = vunpack.c.0.s8 %v845
    %v847 = vlaneseq
    %v848 = vshrl.u32 %v847, 7
    %v849 = vsub.s32 %v846, %v848
    %v850 = vrot.slane %v827, %v849
    %851 = vrot.lane.b32.xlu0 %v850, 32
    %v852 = vpop.permute.xlu0 %851
    %v854 = vsel %vm465, %v837, %v852
    %v856 = vsel %vm285, %v854, 0
    %858 = vmatprep.subr.mxu0 %v258
    %859 = vmatpush1.msra.mxu0 %v257
    %860 = vmatprep.subr.mxu0 %v260
    %861 = vmatpush1.msra.mxu0 %v259
    %862 = vmatprep.subr.mxu0 %v262
    %863 = vmatpush1.msra.mxu0 %v261
    %864 = vmatprep.subr.mxu0 %v264
    %865 = vmatpush1.msra.mxu0 %v263
    %866 = vmatprep.subr.mxu0 %v266
    %867 = vmatpush1.msra.mxu0 %v265
    %868 = vmatprep.subr.mxu0 %v268
    %869 = vmatpush1.msra.mxu0 %v267
    %870 = vmatprep.subr.mxu0 %v270
    %871 = vmatpush1.msra.mxu0 %v269
    %872 = vmatprep.subr.mxu0 %v272
    %873 = vmatpush1.msra.mxu0 %v271
    %874 = vmatprep.subr.mxu0 0.0
    %875 = vmatpush1.msra.mxu0 0.0
    %876 = vmatprep.subr.mxu0 0.0
    %877 = vmatpush1.msra.mxu0 0.0
    %878 = vmatprep.subr.mxu0 0.0
    %879 = vmatpush1.msra.mxu0 0.0
    %880 = vmatprep.subr.mxu0 0.0
    %881 = vmatpush1.msra.mxu0 0.0
    %882 = vmatprep.subr.mxu0 0.0
    %883 = vmatpush1.msra.mxu0 0.0
    %884 = vmatprep.subr.mxu0 0.0
    %885 = vmatpush1.msra.mxu0 0.0
    %886 = vmatprep.subr.mxu0 0.0
    %887 = vmatpush1.msra.mxu0 0.0
    %888 = vmatprep.subr.mxu0 0.0
    %889 = vmatpush1.msra.mxu0 0.0
    %890 = vmatprep.subr.mxu0 0.0
    %891 = vmatpush1.msra.mxu0 0.0
    %892 = vmatprep.subr.mxu0 0.0
    %893 = vmatpush1.msra.mxu0 0.0
    %894 = vmatprep.subr.mxu0 0.0
    %895 = vmatpush1.msra.mxu0 0.0
    %896 = vmatprep.subr.mxu0 0.0
    %897 = vmatpush1.msra.mxu0 0.0
    %898 = vmatprep.subr.mxu0 0.0
    %899 = vmatpush1.msra.mxu0 0.0
    %900 = vmatprep.subr.mxu0 0.0
    %901 = vmatpush1.msra.mxu0 0.0
    %902 = vmatprep.subr.mxu0 0.0
    %903 = vmatpush1.msra.mxu0 0.0
    %904 = vmatprep.subr.mxu0 0.0
    %905 = vmatpush1.msra.mxu0 0.0
    %906 = vmatprep.subr.mxu0 0.0
    %907 = vmatpush1.msra.mxu0 0.0
    %908 = vmatprep.subr.mxu0 0.0
    %909 = vmatpush1.msra.mxu0 0.0
    %910 = vmatprep.subr.mxu0 0.0
    %911 = vmatpush1.msra.mxu0 0.0
    %912 = vmatprep.subr.mxu0 0.0
    %913 = vmatpush1.msra.mxu0 0.0
    %914 = vmatprep.subr.mxu0 0.0
    %915 = vmatpush1.msra.mxu0 0.0
    %916 = vmatprep.subr.mxu0 0.0
    %917 = vmatpush1.msra.mxu0 0.0
    %918 = vmatprep.subr.mxu0 0.0
    %919 = vmatpush1.msra.mxu0 0.0
    %920 = vmatprep.subr.mxu0 0.0
    %921 = vmatpush1.msra.mxu0 0.0
    %922 = vmatprep.mubr.f32.mxu0 0.0
    %923 = vmatmul.mubr.f32.gmra.mrb[0].mxu0 %v856
    %v924 = vpop.f32.mrb[0].mxu0
    %v925 = vadd.f32 %v278, %v924
    %v926 = vpop.f32.mrb[0].mxu0
    %v927 = vadd.f32 %v282, %v926
    %928 = vdwg.mxu0
    %s929 = scalar_lea.vmem [#allocation2], 12
    %v930 = vld [vmem:[%s929] sm:$0xf]
    %s931 = scalar_lea.vmem [#allocation2], 16
    %v932 = vld [vmem:[%s931] sm:$0xf]
    %v933 = vadd.f32 %v930, %v925
    %v934 = vxor.u32 %v933, 2147483648
    %v935 = vmul.f32 %v934, 1.442695
    %v936 = vpow.pop %v935
    %v937 = vadd.f32 %v936, 1.0
    %v938 = vrcp.pop %v937
    %v939 = vmul.f32 1.0, %v938
    %v942 = vunpack.c.l.s4 1983009808
    %v943 = vunpack.c.0.s8 %v942
    %v944 = vlaneseq
    %v945 = vshrl.u32 %v944, 7
    %v946 = vsub.s32 %v943, %v945
    %v947 = vrot.slane %v925, %v946
    %948 = vrot.lane.b32.xlu0 %v947, 64
    %v949 = vpop.permute.xlu0 %948
    %v951 = vmul.f32 %v939, %v949
    %953 = vrot.lane.b32.xlu0 %v951, 64
    %v954 = vpop.permute.xlu0 %953
    %v956 = vadd.f32 %v930, %v954
    %v957 = vtanh.pop %v956
    %v958 = vsub.f32 1.0, %v939
    %960 = vrot.lane.b32.xlu0 %v957, 96
    %v961 = vpop.permute.xlu0 %960
    %v963 = vmul.f32 %v958, %v961
    %v965 = vunpack.c.l.s4 1983009808
    %v966 = vunpack.c.0.s8 %v965
    %v967 = vlaneseq
    %v968 = vshrl.u32 %v967, 7
    %v969 = vsub.s32 %v966, %v968
    %v970 = vrot.slane %v854, %v969
    %971 = vrot.lane.b32.xlu0 %v970, 32
    %v972 = vpop.permute.xlu0 %971
    %v974 = vmul.f32 %v939, %v972
    %v975 = vadd.f32 %v963, %v974
    %v976 = vadd.f32 %v932, %v925
    %v977 = vxor.u32 %v976, 2147483648
    %v978 = vmul.f32 %v977, 1.442695
    %v979 = vpow.pop %v978
    %v980 = vadd.f32 %v979, 1.0
    %v981 = vrcp.pop %v980
    %v982 = vmul.f32 1.0, %v981
    %v984 = vrot.slane %v932, 2
    %v986 = vadd.f32 %v984, %v927
    %v987 = vxor.u32 %v986, 2147483648
    %v988 = vmul.f32 %v987, 1.442695
    %v989 = vpow.pop %v988
    %v990 = vadd.f32 %v989, 1.0
    %v991 = vrcp.pop %v990
    %v992 = vmul.f32 1.0, %v991
    %v995 = vunpack.c.l.s4 1983009808
    %v996 = vunpack.c.0.s8 %v995
    %v997 = vlaneseq
    %v998 = vshrl.u32 %v997, 7
    %v999 = vsub.s32 %v996, %v998
    %v1000 = vrot.slane %v927, %v999
    %1001 = vrot.lane.b32.xlu0 %v1000, 64
    %v1002 = vpop.permute.xlu0 %1001
    %v1004 = vmul.f32 %v982, %v1002
    %1005 = vrot.lane.b32.xlu0 %v932, 96
    %v1006 = vpop.permute.xlu0 %1005
    %v1007 = vrot.slane %v1006, 2
    %1010 = vrot.lane.b32.xlu0 %v1004, 32
    %v1011 = vpop.permute.xlu0 %1010
    %v1013 = vadd.f32 %v1007, %v1011
    %v1014 = vtanh.pop %v1013
    %v1015 = vsub.f32 1.0, %v992
    %v1016 = vmul.f32 %v1015, %v1014
    %1017 = vrot.lane.b32.xlu0 %v970, 96
    %v1018 = vpop.permute.xlu0 %1017
    %v1020 = vmul.f32 %v992, %v1018
    %v1021 = vadd.f32 %v1016, %v1020
    %v1024 = vunpack.c.l.s4 1983009808
    %v1025 = vunpack.c.0.s8 %v1024
    %v1026 = vlaneseq
    %v1027 = vshrl.u32 %v1026, 7
    %v1028 = vsub.s32 %v1025, %v1027
    %v1029 = vrot.slane %v975, %v1028
    %1030 = vrot.lane.b32.xlu0 %v1029, 96
    %v1031 = vpop.permute.xlu0 %1030
    %s1033 = scalar_lea.vmem [#allocation3], 6
    %1034 = vst.msk [vmem:[%s1033] sm:$0x3] %vm450, %v1031
    %s1035 = scalar_lea.vmem [#allocation4], 8
    %1036 = vst.msk [vmem:[%s1035] sm:$0x3] %vm450, %v1021
    %v1039 = vunpack.c.l.s4 1983009808
    %v1040 = vunpack.c.0.s8 %v1039
    %v1041 = vlaneseq
    %v1042 = vshrl.u32 %v1041, 7
    %v1043 = vsub.s32 %v1040, %v1042
    %v1044 = vrot.slane %v1021, %v1043
    %1045 = vrot.lane.b32.xlu0 %v1044, 32
    %v1046 = vpop.permute.xlu0 %1045
    %v1048 = vsel %vm465, %v1031, %v1046
    %v1050 = vsel %vm285, %v1048, 0
    %1052 = vmatprep.subr.mxu0 %v258
    %1053 = vmatpush1.msra.mxu0 %v257
    %1054 = vmatprep.subr.mxu0 %v260
    %1055 = vmatpush1.msra.mxu0 %v259
    %1056 = vmatprep.subr.mxu0 %v262
    %1057 = vmatpush1.msra.mxu0 %v261
    %1058 = vmatprep.subr.mxu0 %v264
    %1059 = vmatpush1.msra.mxu0 %v263
    %1060 = vmatprep.subr.mxu0 %v266
    %1061 = vmatpush1.msra.mxu0 %v265
    %1062 = vmatprep.subr.mxu0 %v268
    %1063 = vmatpush1.msra.mxu0 %v267
    %1064 = vmatprep.subr.mxu0 %v270
    %1065 = vmatpush1.msra.mxu0 %v269
    %1066 = vmatprep.subr.mxu0 %v272
    %1067 = vmatpush1.msra.mxu0 %v271
    %1068 = vmatprep.subr.mxu0 0.0
    %1069 = vmatpush1.msra.mxu0 0.0
    %1070 = vmatprep.subr.mxu0 0.0
    %1071 = vmatpush1.msra.mxu0 0.0
    %1072 = vmatprep.subr.mxu0 0.0
    %1073 = vmatpush1.msra.mxu0 0.0
    %1074 = vmatprep.subr.mxu0 0.0
    %1075 = vmatpush1.msra.mxu0 0.0
    %1076 = vmatprep.subr.mxu0 0.0
    %1077 = vmatpush1.msra.mxu0 0.0
    %1078 = vmatprep.subr.mxu0 0.0
    %1079 = vmatpush1.msra.mxu0 0.0
    %1080 = vmatprep.subr.mxu0 0.0
    %1081 = vmatpush1.msra.mxu0 0.0
    %1082 = vmatprep.subr.mxu0 0.0
    %1083 = vmatpush1.msra.mxu0 0.0
    %1084 = vmatprep.subr.mxu0 0.0
    %1085 = vmatpush1.msra.mxu0 0.0
    %1086 = vmatprep.subr.mxu0 0.0
    %1087 = vmatpush1.msra.mxu0 0.0
    %1088 = vmatprep.subr.mxu0 0.0
    %1089 = vmatpush1.msra.mxu0 0.0
    %1090 = vmatprep.subr.mxu0 0.0
    %1091 = vmatpush1.msra.mxu0 0.0
    %1092 = vmatprep.subr.mxu0 0.0
    %1093 = vmatpush1.msra.mxu0 0.0
    %1094 = vmatprep.subr.mxu0 0.0
    %1095 = vmatpush1.msra.mxu0 0.0
    %1096 = vmatprep.subr.mxu0 0.0
    %1097 = vmatpush1.msra.mxu0 0.0
    %1098 = vmatprep.subr.mxu0 0.0
    %1099 = vmatpush1.msra.mxu0 0.0
    %1100 = vmatprep.subr.mxu0 0.0
    %1101 = vmatpush1.msra.mxu0 0.0
    %1102 = vmatprep.subr.mxu0 0.0
    %1103 = vmatpush1.msra.mxu0 0.0
    %1104 = vmatprep.subr.mxu0 0.0
    %1105 = vmatpush1.msra.mxu0 0.0
    %1106 = vmatprep.subr.mxu0 0.0
    %1107 = vmatpush1.msra.mxu0 0.0
    %1108 = vmatprep.subr.mxu0 0.0
    %1109 = vmatpush1.msra.mxu0 0.0
    %1110 = vmatprep.subr.mxu0 0.0
    %1111 = vmatpush1.msra.mxu0 0.0
    %1112 = vmatprep.subr.mxu0 0.0
    %1113 = vmatpush1.msra.mxu0 0.0
    %1114 = vmatprep.subr.mxu0 0.0
    %1115 = vmatpush1.msra.mxu0 0.0
    %1116 = vmatprep.mubr.f32.mxu0 0.0
    %1117 = vmatmul.mubr.f32.gmra.mrb[0].mxu0 %v1050
    %v1118 = vpop.f32.mrb[0].mxu0
    %v1119 = vadd.f32 %v278, %v1118
    %v1120 = vpop.f32.mrb[0].mxu0
    %v1121 = vadd.f32 %v282, %v1120
    %1122 = vdwg.mxu0
    %v1123 = vld [vmem:[%s931] sm:$0xf]
    %v1124 = vld [vmem:[%s929] sm:$0xf]
    %v1125 = vadd.f32 %v1123, %v1119
    %v1126 = vxor.u32 %v1125, 2147483648
    %v1127 = vmul.f32 %v1126, 1.442695
    %v1128 = vpow.pop %v1127
    %v1129 = vadd.f32 %v1128, 1.0
    %v1130 = vrcp.pop %v1129
    %v1131 = vmul.f32 1.0, %v1130
    %v1134 = vunpack.c.l.s4 1983009808
    %v1135 = vunpack.c.0.s8 %v1134
    %v1136 = vlaneseq
    %v1137 = vshrl.u32 %v1136, 7
    %v1138 = vsub.s32 %v1135, %v1137
    %v1139 = vrot.slane %v1119, %v1138
    %1140 = vrot.lane.b32.xlu0 %v1139, 64
    %v1141 = vpop.permute.xlu0 %1140
    %v1143 = vmul.f32 %v1131, %v1141
    %1145 = vrot.lane.b32.xlu0 %v1143, 64
    %v1146 = vpop.permute.xlu0 %1145
    %v1148 = vadd.f32 %v1123, %v1146
    %v1149 = vtanh.pop %v1148
    %v1150 = vsub.f32 1.0, %v1131
    %1152 = vrot.lane.b32.xlu0 %v1149, 96
    %v1153 = vpop.permute.xlu0 %1152
    %v1155 = vmul.f32 %v1150, %v1153
    %v1157 = vunpack.c.l.s4 1983009808
    %v1158 = vunpack.c.0.s8 %v1157
    %v1159 = vlaneseq
    %v1160 = vshrl.u32 %v1159, 7
    %v1161 = vsub.s32 %v1158, %v1160
    %v1162 = vrot.slane %v1048, %v1161
    %1163 = vrot.lane.b32.xlu0 %v1162, 32
    %v1164 = vpop.permute.xlu0 %1163
    %v1166 = vmul.f32 %v1131, %v1164
    %v1167 = vadd.f32 %v1155, %v1166
    %v1168 = vadd.f32 %v1124, %v1119
    %v1169 = vxor.u32 %v1168, 2147483648
    %v1170 = vmul.f32 %v1169, 1.442695
    %v1171 = vpow.pop %v1170
    %v1172 = vadd.f32 %v1171, 1.0
    %v1173 = vrcp.pop %v1172
    %v1174 = vmul.f32 1.0, %v1173
    %v1176 = vrot.slane %v1124, 2
    %v1178 = vadd.f32 %v1176, %v1121
    %v1179 = vxor.u32 %v1178, 2147483648
    %v1180 = vmul.f32 %v1179, 1.442695
    %v1181 = vpow.pop %v1180
    %v1182 = vadd.f32 %v1181, 1.0
    %v1183 = vrcp.pop %v1182
    %v1184 = vmul.f32 1.0, %v1183
    %v1187 = vunpack.c.l.s4 1983009808
    %v1188 = vunpack.c.0.s8 %v1187
    %v1189 = vlaneseq
    %v1190 = vshrl.u32 %v1189, 7
    %v1191 = vsub.s32 %v1188, %v1190
    %v1192 = vrot.slane %v1121, %v1191
    %1193 = vrot.lane.b32.xlu0 %v1192, 64
    %v1194 = vpop.permute.xlu0 %1193
    %v1196 = vmul.f32 %v1174, %v1194
    %1197 = vrot.lane.b32.xlu0 %v1124, 96
    %v1198 = vpop.permute.xlu0 %1197
    %v1199 = vrot.slane %v1198, 2
    %1202 = vrot.lane.b32.xlu0 %v1196, 32
    %v1203 = vpop.permute.xlu0 %1202
    %v1205 = vadd.f32 %v1199, %v1203
    %v1206 = vtanh.pop %v1205
    %v1207 = vsub.f32 1.0, %v1184
    %v1208 = vmul.f32 %v1207, %v1206
    %1209 = vrot.lane.b32.xlu0 %v1162, 96
    %v1210 = vpop.permute.xlu0 %1209
    %v1212 = vmul.f32 %v1184, %v1210
    %v1213 = vadd.f32 %v1208, %v1212
    %v1216 = vunpack.c.l.s4 1983009808
    %v1217 = vunpack.c.0.s8 %v1216
    %v1218 = vlaneseq
    %v1219 = vshrl.u32 %v1218, 7
    %v1220 = vsub.s32 %v1217, %v1219
    %v1221 = vrot.slane %v1167, %v1220
    %1222 = vrot.lane.b32.xlu0 %v1221, 96
    %v1223 = vpop.permute.xlu0 %1222
    %s1225 = scalar_lea.vmem [#allocation3], 8
    %1226 = vst.msk [vmem:[%s1225] sm:$0x3] %vm450, %v1223
    %s1227 = scalar_lea.vmem [#allocation4], 6
    %1228 = vst.msk [vmem:[%s1227] sm:$0x3] %vm450, %v1213
    %v1231 = vunpack.c.l.s4 1983009808
    %v1232 = vunpack.c.0.s8 %v1231
    %v1233 = vlaneseq
    %v1234 = vshrl.u32 %v1233, 7
    %v1235 = vsub.s32 %v1232, %v1234
    %v1236 = vrot.slane %v1213, %v1235
    %1237 = vrot.lane.b32.xlu0 %v1236, 32
    %v1238 = vpop.permute.xlu0 %1237
    %v1240 = vsel %vm465, %v1223, %v1238
    %v1242 = vsel %vm285, %v1240, 0
    %1244 = vmatprep.subr.mxu0 %v258
    %1245 = vmatpush1.msra.mxu0 %v257
    %1246 = vmatprep.subr.mxu0 %v260
    %1247 = vmatpush1.msra.mxu0 %v259
    %1248 = vmatprep.subr.mxu0 %v262
    %1249 = vmatpush1.msra.mxu0 %v261
    %1250 = vmatprep.subr.mxu0 %v264
    %1251 = vmatpush1.msra.mxu0 %v263
    %1252 = vmatprep.subr.mxu0 %v266
    %1253 = vmatpush1.msra.mxu0 %v265
    %1254 = vmatprep.subr.mxu0 %v268
    %1255 = vmatpush1.msra.mxu0 %v267
    %1256 = vmatprep.subr.mxu0 %v270
    %1257 = vmatpush1.msra.mxu0 %v269
    %1258 = vmatprep.subr.mxu0 %v272
    %1259 = vmatpush1.msra.mxu0 %v271
    %1260 = vmatprep.subr.mxu0 0.0
    %1261 = vmatpush1.msra.mxu0 0.0
    %1262 = vmatprep.subr.mxu0 0.0
    %1263 = vmatpush1.msra.mxu0 0.0
    %1264 = vmatprep.subr.mxu0 0.0
    %1265 = vmatpush1.msra.mxu0 0.0
    %1266 = vmatprep.subr.mxu0 0.0
    %1267 = vmatpush1.msra.mxu0 0.0
    %1268 = vmatprep.subr.mxu0 0.0
    %1269 = vmatpush1.msra.mxu0 0.0
    %1270 = vmatprep.subr.mxu0 0.0
    %1271 = vmatpush1.msra.mxu0 0.0
    %1272 = vmatprep.subr.mxu0 0.0
    %1273 = vmatpush1.msra.mxu0 0.0
    %1274 = vmatprep.subr.mxu0 0.0
    %1275 = vmatpush1.msra.mxu0 0.0
    %1276 = vmatprep.subr.mxu0 0.0
    %1277 = vmatpush1.msra.mxu0 0.0
    %1278 = vmatprep.subr.mxu0 0.0
    %1279 = vmatpush1.msra.mxu0 0.0
    %1280 = vmatprep.subr.mxu0 0.0
    %1281 = vmatpush1.msra.mxu0 0.0
    %1282 = vmatprep.subr.mxu0 0.0
    %1283 = vmatpush1.msra.mxu0 0.0
    %1284 = vmatprep.subr.mxu0 0.0
    %1285 = vmatpush1.msra.mxu0 0.0
    %1286 = vmatprep.subr.mxu0 0.0
    %1287 = vmatpush1.msra.mxu0 0.0
    %1288 = vmatprep.subr.mxu0 0.0
    %1289 = vmatpush1.msra.mxu0 0.0
    %1290 = vmatprep.subr.mxu0 0.0
    %1291 = vmatpush1.msra.mxu0 0.0
    %1292 = vmatprep.subr.mxu0 0.0
    %1293 = vmatpush1.msra.mxu0 0.0
    %1294 = vmatprep.subr.mxu0 0.0
    %1295 = vmatpush1.msra.mxu0 0.0
    %1296 = vmatprep.subr.mxu0 0.0
    %1297 = vmatpush1.msra.mxu0 0.0
    %1298 = vmatprep.subr.mxu0 0.0
    %1299 = vmatpush1.msra.mxu0 0.0
    %1300 = vmatprep.subr.mxu0 0.0
    %1301 = vmatpush1.msra.mxu0 0.0
    %1302 = vmatprep.subr.mxu0 0.0
    %1303 = vmatpush1.msra.mxu0 0.0
    %1304 = vmatprep.subr.mxu0 0.0
    %1305 = vmatpush1.msra.mxu0 0.0
    %1306 = vmatprep.subr.mxu0 0.0
    %1307 = vmatpush1.msra.mxu0 0.0
    %1308 = vmatprep.mubr.f32.mxu0 0.0
    %1309 = vmatmul.mubr.f32.gmra.mrb[0].mxu0 %v1242
    %v1310 = vpop.f32.mrb[0].mxu0
    %v1311 = vadd.f32 %v278, %v1310
    %v1312 = vpop.f32.mrb[0].mxu0
    %v1313 = vadd.f32 %v282, %v1312
    %1314 = vdwg.mxu0
    %v1315 = vld [vmem:[%s737] sm:$0xf]
    %v1316 = vld [vmem:[%s735] sm:$0xf]
    %v1317 = vadd.f32 %v1315, %v1311
    %v1318 = vxor.u32 %v1317, 2147483648
    %v1319 = vmul.f32 %v1318, 1.442695
    %v1320 = vpow.pop %v1319
    %v1321 = vadd.f32 %v1320, 1.0
    %v1322 = vrcp.pop %v1321
    %v1323 = vmul.f32 1.0, %v1322
    %v1326 = vunpack.c.l.s4 1983009808
    %v1327 = vunpack.c.0.s8 %v1326
    %v1328 = vlaneseq
    %v1329 = vshrl.u32 %v1328, 7
    %v1330 = vsub.s32 %v1327, %v1329
    %v1331 = vrot.slane %v1311, %v1330
    %1332 = vrot.lane.b32.xlu0 %v1331, 64
    %v1333 = vpop.permute.xlu0 %1332
    %v1335 = vmul.f32 %v1323, %v1333
    %1337 = vrot.lane.b32.xlu0 %v1335, 64
    %v1338 = vpop.permute.xlu0 %1337
    %v1340 = vadd.f32 %v1315, %v1338
    %v1341 = vtanh.pop %v1340
    %v1342 = vsub.f32 1.0, %v1323
    %1344 = vrot.lane.b32.xlu0 %v1341, 96
    %v1345 = vpop.permute.xlu0 %1344
    %v1347 = vmul.f32 %v1342, %v1345
    %v1349 = vunpack.c.l.s4 1983009808
    %v1350 = vunpack.c.0.s8 %v1349
    %v1351 = vlaneseq
    %v1352 = vshrl.u32 %v1351, 7
    %v1353 = vsub.s32 %v1350, %v1352
    %v1354 = vrot.slane %v1240, %v1353
    %1355 = vrot.lane.b32.xlu0 %v1354, 32
    %v1356 = vpop.permute.xlu0 %1355
    %v1358 = vmul.f32 %v1323, %v1356
    %v1359 = vadd.f32 %v1347, %v1358
    %v1360 = vadd.f32 %v1316, %v1311
    %v1361 = vxor.u32 %v1360, 2147483648
    %v1362 = vmul.f32 %v1361, 1.442695
    %v1363 = vpow.pop %v1362
    %v1364 = vadd.f32 %v1363, 1.0
    %v1365 = vrcp.pop %v1364
    %v1366 = vmul.f32 1.0, %v1365
    %v1368 = vrot.slane %v1316, 2
    %v1370 = vadd.f32 %v1368, %v1313
    %v1371 = vxor.u32 %v1370, 2147483648
    %v1372 = vmul.f32 %v1371, 1.442695
    %v1373 = vpow.pop %v1372
    %v1374 = vadd.f32 %v1373, 1.0
    %v1375 = vrcp.pop %v1374
    %v1376 = vmul.f32 1.0, %v1375
    %v1379 = vunpack.c.l.s4 1983009808
    %v1380 = vunpack.c.0.s8 %v1379
    %v1381 = vlaneseq
    %v1382 = vshrl.u32 %v1381, 7
    %v1383 = vsub.s32 %v1380, %v1382
    %v1384 = vrot.slane %v1313, %v1383
    %1385 = vrot.lane.b32.xlu0 %v1384, 64
    %v1386 = vpop.permute.xlu0 %1385
    %v1388 = vmul.f32 %v1366, %v1386
    %1389 = vrot.lane.b32.xlu0 %v1316, 96
    %v1390 = vpop.permute.xlu0 %1389
    %v1391 = vrot.slane %v1390, 2
    %1394 = vrot.lane.b32.xlu0 %v1388, 32
    %v1395 = vpop.permute.xlu0 %1394
    %v1397 = vadd.f32 %v1391, %v1395
    %v1398 = vtanh.pop %v1397
    %v1399 = vsub.f32 1.0, %v1376
    %v1400 = vmul.f32 %v1399, %v1398
    %1401 = vrot.lane.b32.xlu0 %v1354, 96
    %v1402 = vpop.permute.xlu0 %1401
    %v1404 = vmul.f32 %v1376, %v1402
    %v1405 = vadd.f32 %v1400, %v1404
    %v1408 = vunpack.c.l.s4 1983009808
    %v1409 = vunpack.c.0.s8 %v1408
    %v1410 = vlaneseq
    %v1411 = vshrl.u32 %v1410, 7
    %v1412 = vsub.s32 %v1409, %v1411
    %v1413 = vrot.slane %v1359, %v1412
    %1414 = vrot.lane.b32.xlu0 %v1413, 96
    %v1415 = vpop.permute.xlu0 %1414
    %s1417 = scalar_lea.vmem [#allocation3], 10
    %1418 = vst.msk [vmem:[%s1417] sm:$0x3] %vm450, %v1415
    %s1419 = scalar_lea.vmem [#allocation4], 4
    %1420 = vst.msk [vmem:[%s1419] sm:$0x3] %vm450, %v1405
    %v1423 = vunpack.c.l.s4 1983009808
    %v1424 = vunpack.c.0.s8 %v1423
    %v1425 = vlaneseq
    %v1426 = vshrl.u32 %v1425, 7
    %v1427 = vsub.s32 %v1424, %v1426
    %v1428 = vrot.slane %v1405, %v1427
    %1429 = vrot.lane.b32.xlu0 %v1428, 32
    %v1430 = vpop.permute.xlu0 %1429
    %v1432 = vsel %vm465, %v1415, %v1430
    %v1434 = vsel %vm285, %v1432, 0
    %1436 = vmatprep.subr.mxu0 %v258
    %1437 = vmatpush1.msra.mxu0 %v257
    %1438 = vmatprep.subr.mxu0 %v260
    %1439 = vmatpush1.msra.mxu0 %v259
    %1440 = vmatprep.subr.mxu0 %v262
    %1441 = vmatpush1.msra.mxu0 %v261
    %1442 = vmatprep.subr.mxu0 %v264
    %1443 = vmatpush1.msra.mxu0 %v263
    %1444 = vmatprep.subr.mxu0 %v266
    %1445 = vmatpush1.msra.mxu0 %v265
    %1446 = vmatprep.subr.mxu0 %v268
    %1447 = vmatpush1.msra.mxu0 %v267
    %1448 = vmatprep.subr.mxu0 %v270
    %1449 = vmatpush1.msra.mxu0 %v269
    %1450 = vmatprep.subr.mxu0 %v272
    %1451 = vmatpush1.msra.mxu0 %v271
    %1452 = vmatprep.subr.mxu0 0.0
    %1453 = vmatpush1.msra.mxu0 0.0
    %1454 = vmatprep.subr.mxu0 0.0
    %1455 = vmatpush1.msra.mxu0 0.0
    %1456 = vmatprep.subr.mxu0 0.0
    %1457 = vmatpush1.msra.mxu0 0.0
    %1458 = vmatprep.subr.mxu0 0.0
    %1459 = vmatpush1.msra.mxu0 0.0
    %1460 = vmatprep.subr.mxu0 0.0
    %1461 = vmatpush1.msra.mxu0 0.0
    %1462 = vmatprep.subr.mxu0 0.0
    %1463 = vmatpush1.msra.mxu0 0.0
    %1464 = vmatprep.subr.mxu0 0.0
    %1465 = vmatpush1.msra.mxu0 0.0
    %1466 = vmatprep.subr.mxu0 0.0
    %1467 = vmatpush1.msra.mxu0 0.0
    %1468 = vmatprep.subr.mxu0 0.0
    %1469 = vmatpush1.msra.mxu0 0.0
    %1470 = vmatprep.subr.mxu0 0.0
    %1471 = vmatpush1.msra.mxu0 0.0
    %1472 = vmatprep.subr.mxu0 0.0
    %1473 = vmatpush1.msra.mxu0 0.0
    %1474 = vmatprep.subr.mxu0 0.0
    %1475 = vmatpush1.msra.mxu0 0.0
    %1476 = vmatprep.subr.mxu0 0.0
    %1477 = vmatpush1.msra.mxu0 0.0
    %1478 = vmatprep.subr.mxu0 0.0
    %1479 = vmatpush1.msra.mxu0 0.0
    %1480 = vmatprep.subr.mxu0 0.0
    %1481 = vmatpush1.msra.mxu0 0.0
    %1482 = vmatprep.subr.mxu0 0.0
    %1483 = vmatpush1.msra.mxu0 0.0
    %1484 = vmatprep.subr.mxu0 0.0
    %1485 = vmatpush1.msra.mxu0 0.0
    %1486 = vmatprep.subr.mxu0 0.0
    %1487 = vmatpush1.msra.mxu0 0.0
    %1488 = vmatprep.subr.mxu0 0.0
    %1489 = vmatpush1.msra.mxu0 0.0
    %1490 = vmatprep.subr.mxu0 0.0
    %1491 = vmatpush1.msra.mxu0 0.0
    %1492 = vmatprep.subr.mxu0 0.0
    %1493 = vmatpush1.msra.mxu0 0.0
    %1494 = vmatprep.subr.mxu0 0.0
    %1495 = vmatpush1.msra.mxu0 0.0
    %1496 = vmatprep.subr.mxu0 0.0
    %1497 = vmatpush1.msra.mxu0 0.0
    %1498 = vmatprep.subr.mxu0 0.0
    %1499 = vmatpush1.msra.mxu0 0.0
    %1500 = vmatprep.mubr.f32.mxu0 0.0
    %1501 = vmatmul.mubr.f32.gmra.mrb[0].mxu0 %v1434
    %v1502 = vpop.f32.mrb[0].mxu0
    %v1503 = vadd.f32 %v278, %v1502
    %v1504 = vpop.f32.mrb[0].mxu0
    %v1505 = vadd.f32 %v282, %v1504
    %1506 = vdwg.mxu0
    %v1507 = vld [vmem:[%s543] sm:$0xf]
    %v1508 = vld [vmem:[%s541] sm:$0xf]
    %v1509 = vadd.f32 %v1507, %v1503
    %v1510 = vxor.u32 %v1509, 2147483648
    %v1511 = vmul.f32 %v1510, 1.442695
    %v1512 = vpow.pop %v1511
    %v1513 = vadd.f32 %v1512, 1.0
    %v1514 = vrcp.pop %v1513
    %v1515 = vmul.f32 1.0, %v1514
    %v1518 = vunpack.c.l.s4 1983009808
    %v1519 = vunpack.c.0.s8 %v1518
    %v1520 = vlaneseq
    %v1521 = vshrl.u32 %v1520, 7
    %v1522 = vsub.s32 %v1519, %v1521
    %v1523 = vrot.slane %v1503, %v1522
    %1524 = vrot.lane.b32.xlu0 %v1523, 64
    %v1525 = vpop.permute.xlu0 %1524
    %v1527 = vmul.f32 %v1515, %v1525
    %1529 = vrot.lane.b32.xlu0 %v1527, 64
    %v1530 = vpop.permute.xlu0 %1529
    %v1532 = vadd.f32 %v1507, %v1530
    %v1533 = vtanh.pop %v1532
    %v1534 = vsub.f32 1.0, %v1515
    %1536 = vrot.lane.b32.xlu0 %v1533, 96
    %v1537 = vpop.permute.xlu0 %1536
    %v1539 = vmul.f32 %v1534, %v1537
    %v1541 = vunpack.c.l.s4 1983009808
    %v1542 = vunpack.c.0.s8 %v1541
    %v1543 = vlaneseq
    %v1544 = vshrl.u32 %v1543, 7
    %v1545 = vsub.s32 %v1542, %v1544
    %v1546 = vrot.slane %v1432, %v1545
    %1547 = vrot.lane.b32.xlu0 %v1546, 32
    %v1548 = vpop.permute.xlu0 %1547
    %v1550 = vmul.f32 %v1515, %v1548
    %v1551 = vadd.f32 %v1539, %v1550
    %v1552 = vadd.f32 %v1508, %v1503
    %v1553 = vxor.u32 %v1552, 2147483648
    %v1554 = vmul.f32 %v1553, 1.442695
    %v1555 = vpow.pop %v1554
    %v1556 = vadd.f32 %v1555, 1.0
    %v1557 = vrcp.pop %v1556
    %v1558 = vmul.f32 1.0, %v1557
    %v1560 = vrot.slane %v1508, 2
    %v1562 = vadd.f32 %v1560, %v1505
    %v1563 = vxor.u32 %v1562, 2147483648
    %v1564 = vmul.f32 %v1563, 1.442695
    %v1565 = vpow.pop %v1564
    %v1566 = vadd.f32 %v1565, 1.0
    %v1567 = vrcp.pop %v1566
    %v1568 = vmul.f32 1.0, %v1567
    %v1571 = vunpack.c.l.s4 1983009808
    %v1572 = vunpack.c.0.s8 %v1571
    %v1573 = vlaneseq
    %v1574 = vshrl.u32 %v1573, 7
    %v1575 = vsub.s32 %v1572, %v1574
    %v1576 = vrot.slane %v1505, %v1575
    %1577 = vrot.lane.b32.xlu0 %v1576, 64
    %v1578 = vpop.permute.xlu0 %1577
    %v1580 = vmul.f32 %v1558, %v1578
    %1581 = vrot.lane.b32.xlu0 %v1508, 96
    %v1582 = vpop.permute.xlu0 %1581
    %v1583 = vrot.slane %v1582, 2
    %1586 = vrot.lane.b32.xlu0 %v1580, 32
    %v1587 = vpop.permute.xlu0 %1586
    %v1589 = vadd.f32 %v1583, %v1587
    %v1590 = vtanh.pop %v1589
    %v1591 = vsub.f32 1.0, %v1568
    %v1592 = vmul.f32 %v1591, %v1590
    %1593 = vrot.lane.b32.xlu0 %v1546, 96
    %v1594 = vpop.permute.xlu0 %1593
    %v1596 = vmul.f32 %v1568, %v1594
    %v1597 = vadd.f32 %v1592, %v1596
    %v1600 = vunpack.c.l.s4 1983009808
    %v1601 = vunpack.c.0.s8 %v1600
    %v1602 = vlaneseq
    %v1603 = vshrl.u32 %v1602, 7
    %v1604 = vsub.s32 %v1601, %v1603
    %v1605 = vrot.slane %v1551, %v1604
    %1606 = vrot.lane.b32.xlu0 %v1605, 96
    %v1607 = vpop.permute.xlu0 %1606
    %s1609 = scalar_lea.vmem [#allocation3], 12
    %1610 = vst.msk [vmem:[%s1609] sm:$0x3] %vm450, %v1607
    %s1611 = scalar_lea.vmem [#allocation4], 2
    %1612 = vst.msk [vmem:[%s1611] sm:$0x3] %vm450, %v1597
    %v1615 = vunpack.c.l.s4 1983009808
    %v1616 = vunpack.c.0.s8 %v1615
    %v1617 = vlaneseq
    %v1618 = vshrl.u32 %v1617, 7
    %v1619 = vsub.s32 %v1616, %v1618
    %v1620 = vrot.slane %v1597, %v1619
    %1621 = vrot.lane.b32.xlu0 %v1620, 32
    %v1622 = vpop.permute.xlu0 %1621
    %v1624 = vsel %vm465, %v1607, %v1622
    %v1626 = vsel %vm285, %v1624, 0
    %1628 = vmatprep.subr.mxu0 %v258
    %1629 = vmatpush1.msra.mxu0 %v257
    %1630 = vmatprep.subr.mxu0 %v260
    %1631 = vmatpush1.msra.mxu0 %v259
    %1632 = vmatprep.subr.mxu0 %v262
    %1633 = vmatpush1.msra.mxu0 %v261
    %1634 = vmatprep.subr.mxu0 %v264
    %1635 = vmatpush1.msra.mxu0 %v263
    %1636 = vmatprep.subr.mxu0 %v266
    %1637 = vmatpush1.msra.mxu0 %v265
    %1638 = vmatprep.subr.mxu0 %v268
    %1639 = vmatpush1.msra.mxu0 %v267
    %1640 = vmatprep.subr.mxu0 %v270
    %1641 = vmatpush1.msra.mxu0 %v269
    %1642 = vmatprep.subr.mxu0 %v272
    %1643 = vmatpush1.msra.mxu0 %v271
    %1644 = vmatprep.subr.mxu0 0.0
    %1645 = vmatpush1.msra.mxu0 0.0
    %1646 = vmatprep.subr.mxu0 0.0
    %1647 = vmatpush1.msra.mxu0 0.0
    %1648 = vmatprep.subr.mxu0 0.0
    %1649 = vmatpush1.msra.mxu0 0.0
    %1650 = vmatprep.subr.mxu0 0.0
    %1651 = vmatpush1.msra.mxu0 0.0
    %1652 = vmatprep.subr.mxu0 0.0
    %1653 = vmatpush1.msra.mxu0 0.0
    %1654 = vmatprep.subr.mxu0 0.0
    %1655 = vmatpush1.msra.mxu0 0.0
    %1656 = vmatprep.subr.mxu0 0.0
    %1657 = vmatpush1.msra.mxu0 0.0
    %1658 = vmatprep.subr.mxu0 0.0
    %1659 = vmatpush1.msra.mxu0 0.0
    %1660 = vmatprep.subr.mxu0 0.0
    %1661 = vmatpush1.msra.mxu0 0.0
    %1662 = vmatprep.subr.mxu0 0.0
    %1663 = vmatpush1.msra.mxu0 0.0
    %1664 = vmatprep.subr.mxu0 0.0
    %1665 = vmatpush1.msra.mxu0 0.0
    %1666 = vmatprep.subr.mxu0 0.0
    %1667 = vmatpush1.msra.mxu0 0.0
    %1668 = vmatprep.subr.mxu0 0.0
    %1669 = vmatpush1.msra.mxu0 0.0
    %1670 = vmatprep.subr.mxu0 0.0
    %1671 = vmatpush1.msra.mxu0 0.0
    %1672 = vmatprep.subr.mxu0 0.0
    %1673 = vmatpush1.msra.mxu0 0.0
    %1674 = vmatprep.subr.mxu0 0.0
    %1675 = vmatpush1.msra.mxu0 0.0
    %1676 = vmatprep.subr.mxu0 0.0
    %1677 = vmatpush1.msra.mxu0 0.0
    %1678 = vmatprep.subr.mxu0 0.0
    %1679 = vmatpush1.msra.mxu0 0.0
    %1680 = vmatprep.subr.mxu0 0.0
    %1681 = vmatpush1.msra.mxu0 0.0
    %1682 = vmatprep.subr.mxu0 0.0
    %1683 = vmatpush1.msra.mxu0 0.0
    %1684 = vmatprep.subr.mxu0 0.0
    %1685 = vmatpush1.msra.mxu0 0.0
    %1686 = vmatprep.subr.mxu0 0.0
    %1687 = vmatpush1.msra.mxu0 0.0
    %1688 = vmatprep.subr.mxu0 0.0
    %1689 = vmatpush1.msra.mxu0 0.0
    %1690 = vmatprep.subr.mxu0 0.0
    %1691 = vmatpush1.msra.mxu0 0.0
    %1692 = vmatprep.mubr.f32.mxu0 0.0
    %1693 = vmatmul.mubr.f32.gmra.mrb[0].mxu0 %v1626
    %v1694 = vpop.f32.mrb[0].mxu0
    %v1695 = vadd.f32 %v278, %v1694
    %v1696 = vpop.f32.mrb[0].mxu0
    %v1697 = vadd.f32 %v282, %v1696
    %1698 = vdwg.mxu0
    %v1699 = vld [vmem:[%s361] sm:$0xf]
    %v1700 = vld [vmem:[#allocation2] sm:$0xf]
    %v1701 = vadd.f32 %v1699, %v1695
    %v1702 = vxor.u32 %v1701, 2147483648
    %v1703 = vmul.f32 %v1702, 1.442695
    %v1704 = vpow.pop %v1703
    %v1705 = vadd.f32 %v1704, 1.0
    %v1706 = vrcp.pop %v1705
    %v1707 = vmul.f32 1.0, %v1706
    %v1710 = vunpack.c.l.s4 1983009808
    %v1711 = vunpack.c.0.s8 %v1710
    %v1712 = vlaneseq
    %v1713 = vshrl.u32 %v1712, 7
    %v1714 = vsub.s32 %v1711, %v1713
    %v1715 = vrot.slane %v1695, %v1714
    %1716 = vrot.lane.b32.xlu0 %v1715, 64
    %v1717 = vpop.permute.xlu0 %1716
    %v1719 = vmul.f32 %v1707, %v1717
    %1721 = vrot.lane.b32.xlu0 %v1719, 64
    %v1722 = vpop.permute.xlu0 %1721
    %v1724 = vadd.f32 %v1699, %v1722
    %v1725 = vtanh.pop %v1724
    %v1726 = vsub.f32 1.0, %v1707
    %1728 = vrot.lane.b32.xlu0 %v1725, 96
    %v1729 = vpop.permute.xlu0 %1728
    %v1731 = vmul.f32 %v1726, %v1729
    %v1733 = vunpack.c.l.s4 1983009808
    %v1734 = vunpack.c.0.s8 %v1733
    %v1735 = vlaneseq
    %v1736 = vshrl.u32 %v1735, 7
    %v1737 = vsub.s32 %v1734, %v1736
    %v1738 = vrot.slane %v1624, %v1737
    %1739 = vrot.lane.b32.xlu0 %v1738, 32
    %v1740 = vpop.permute.xlu0 %1739
    %v1742 = vmul.f32 %v1707, %v1740
    %v1743 = vadd.f32 %v1731, %v1742
    %v1744 = vadd.f32 %v1700, %v1695
    %v1745 = vxor.u32 %v1744, 2147483648
    %v1746 = vmul.f32 %v1745, 1.442695
    %v1747 = vpow.pop %v1746
    %v1748 = vadd.f32 %v1747, 1.0
    %v1749 = vrcp.pop %v1748
    %v1750 = vmul.f32 1.0, %v1749
    %v1752 = vrot.slane %v1700, 2
    %v1754 = vadd.f32 %v1752, %v1697
    %v1755 = vxor.u32 %v1754, 2147483648
    %v1756 = vmul.f32 %v1755, 1.442695
    %v1757 = vpow.pop %v1756
    %v1758 = vadd.f32 %v1757, 1.0
    %v1759 = vrcp.pop %v1758
    %v1760 = vmul.f32 1.0, %v1759
    %v1763 = vunpack.c.l.s4 1983009808
    %v1764 = vunpack.c.0.s8 %v1763
    %v1765 = vlaneseq
    %v1766 = vshrl.u32 %v1765, 7
    %v1767 = vsub.s32 %v1764, %v1766
    %v1768 = vrot.slane %v1697, %v1767
    %1769 = vrot.lane.b32.xlu0 %v1768, 64
    %v1770 = vpop.permute.xlu0 %1769
    %v1772 = vmul.f32 %v1750, %v1770
    %1773 = vrot.lane.b32.xlu0 %v1700, 96
    %v1774 = vpop.permute.xlu0 %1773
    %v1775 = vrot.slane %v1774, 2
    %1778 = vrot.lane.b32.xlu0 %v1772, 32
    %v1779 = vpop.permute.xlu0 %1778
    %v1781 = vadd.f32 %v1775, %v1779
    %v1782 = vtanh.pop %v1781
    %v1783 = vsub.f32 1.0, %v1760
    %v1784 = vmul.f32 %v1783, %v1782
    %1785 = vrot.lane.b32.xlu0 %v1738, 96
    %v1786 = vpop.permute.xlu0 %1785
    %v1788 = vmul.f32 %v1760, %v1786
    %v1789 = vadd.f32 %v1784, %v1788
    %v1792 = vunpack.c.l.s4 1983009808
    %v1793 = vunpack.c.0.s8 %v1792
    %v1794 = vlaneseq
    %v1795 = vshrl.u32 %v1794, 7
    %v1796 = vsub.s32 %v1793, %v1795
    %v1797 = vrot.slane %v1743, %v1796
    %1798 = vrot.lane.b32.xlu0 %v1797, 96
    %v1799 = vpop.permute.xlu0 %1798
    %s1801 = scalar_lea.vmem [#allocation3], 14
    %1802 = vst.msk [vmem:[%s1801] sm:$0x3] %vm450, %v1799
    %1803 = vst.msk [vmem:[#allocation4] sm:$0x3] %vm450, %v1789
    %v1806 = vunpack.c.l.s4 1983009808
    %v1807 = vunpack.c.0.s8 %v1806
    %v1808 = vlaneseq
    %v1809 = vshrl.u32 %v1808, 7
    %v1810 = vsub.s32 %v1807, %v1809
    %v1811 = vrot.slane %v1789, %v1810
    %1812 = vrot.lane.b32.xlu0 %v1811, 32
    %v1813 = vpop.permute.xlu0 %1812
    %v1815 = vsel %vm465, %v1799, %v1813
    %1816 = vst.msk [vmem:[#allocation7] sm:$0x3] %vm450, %v1815
    %1818 = vrot.lane.b32.xlu0 %v1815, 96
    %v1819 = vpop.permute.xlu0 %1818
    %s1821 = scalar_lea.vmem [#allocation7], 2
    %1822 = vst.msk [vmem:[%s1821] sm:$0x3] %vm450, %v1819
    %v1823 = vld [vmem:[#allocation3] sm:$0x3]
    %v1824 = vld [vmem:[#allocation3 + $0x2] sm:$0x3]
    %v1825 = vld [vmem:[#allocation3 + $0x4] sm:$0x3]
    %v1826 = vld [vmem:[#allocation3 + $0x6] sm:$0x3]
    %v1827 = vld [vmem:[#allocation3 + $0x8] sm:$0x3]
    %v1828 = vld [vmem:[#allocation3 + $0xa] sm:$0x3]
    %v1829 = vld [vmem:[#allocation3 + $0xc] sm:$0x3]
    %v1830 = vld [vmem:[#allocation3 + $0xe] sm:$0x3]
    %v1831 = vld [vmem:[#allocation4] sm:$0x3]
    %v1832 = vld [vmem:[#allocation4 + $0x2] sm:$0x3]
    %v1833 = vld [vmem:[#allocation4 + $0x4] sm:$0x3]
    %v1834 = vld [vmem:[#allocation4 + $0x6] sm:$0x3]
    %v1835 = vld [vmem:[#allocation4 + $0x8] sm:$0x3]
    %v1836 = vld [vmem:[#allocation4 + $0xa] sm:$0x3]
    %v1837 = vld [vmem:[#allocation4 + $0xc] sm:$0x3]
    %v1838 = vld [vmem:[#allocation4 + $0xe] sm:$0x3]
    %1847 = vrot.lane.b32.xlu0 %v1831, 32
    %v1848 = vpop.permute.xlu0 %1847
    %1849 = vrot.lane.b32.xlu0 %v1832, 32
    %v1850 = vpop.permute.xlu0 %1849
    %1851 = vrot.lane.b32.xlu0 %v1833, 32
    %v1852 = vpop.permute.xlu0 %1851
    %1853 = vrot.lane.b32.xlu0 %v1834, 32
    %v1854 = vpop.permute.xlu0 %1853
    %1855 = vrot.lane.b32.xlu0 %v1835, 32
    %v1856 = vpop.permute.xlu0 %1855
    %1857 = vrot.lane.b32.xlu0 %v1836, 32
    %v1858 = vpop.permute.xlu0 %1857
    %1859 = vrot.lane.b32.xlu0 %v1837, 32
    %v1860 = vpop.permute.xlu0 %1859
    %1861 = vrot.lane.b32.xlu0 %v1838, 32
    %v1862 = vpop.permute.xlu0 %1861
    %v1871 = vsel %vm465, %v1823, %v1848
    %v1872 = vsel %vm465, %v1824, %v1850
    %v1873 = vsel %vm465, %v1825, %v1852
    %v1874 = vsel %vm465, %v1826, %v1854
    %v1875 = vsel %vm465, %v1827, %v1856
    %v1876 = vsel %vm465, %v1828, %v1858
    %v1877 = vsel %vm465, %v1829, %v1860
    %v1878 = vsel %vm465, %v1830, %v1862
    %v1879 = vld [vmem:[%s6] sm:$0xff]
    %v1880 = vld [vmem:[%s6 + $0x8] sm:$0xff]
    %v1881 = vld [vmem:[%s6 + $0x10] sm:$0xff]
    %v1882 = vld [vmem:[%s6 + $0x18] sm:$0xff]
    %v1883 = vld [vmem:[%s6 + $0x20] sm:$0xff]
    %v1884 = vld [vmem:[%s6 + $0x28] sm:$0xff]
    %v1885 = vld [vmem:[%s6 + $0x30] sm:$0xff]
    %v1886 = vld [vmem:[%s6 + $0x38] sm:$0xff]
    %v1887 = vld [vmem:[%s7] sm:$0x1]
    %v1889 = vlaneseq
    %v1890 = vshrl.u32 %v1889, 7
    %v1891 = vsub.s32 0, %v1890
    %v1892 = vrot.slane %v1887, %v1891
    %v1902 = vcombine.low %v1871, %v1872
    %v1903 = vcombine.low %v1873, %v1874
    %v1905 = vunpack.c.l.s4 1983009808
    %v1906 = vunpack.c.0.s8 %v1905
    %v1907 = vlaneseq
    %v1908 = vshrl.u32 %v1907, 7
    %v1909 = vsub.s32 %v1906, %v1908
    %v1910 = vrot.slane %v1902, %v1909
    %v1912 = vunpack.c.l.s4 1983009808
    %v1913 = vunpack.c.0.s8 %v1912
    %v1914 = vlaneseq
    %v1915 = vshrl.u32 %v1914, 7
    %v1916 = vsub.s32 %v1913, %v1915
    %v1917 = vrot.slane %v1903, %v1916
    %v1918 = vcombine.low %v1910, %v1917
    %v1919 = vcombine.low %v1875, %v1876
    %v1920 = vcombine.low %v1877, %v1878
    %v1922 = vunpack.c.l.s4 1983009808
    %v1923 = vunpack.c.0.s8 %v1922
    %v1924 = vlaneseq
    %v1925 = vshrl.u32 %v1924, 7
    %v1926 = vsub.s32 %v1923, %v1925
    %v1927 = vrot.slane %v1919, %v1926
    %v1929 = vunpack.c.l.s4 1983009808
    %v1930 = vunpack.c.0.s8 %v1929
    %v1931 = vlaneseq
    %v1932 = vshrl.u32 %v1931, 7
    %v1933 = vsub.s32 %v1930, %v1932
    %v1934 = vrot.slane %v1920, %v1933
    %v1935 = vcombine.low %v1927, %v1934
    %v1936 = vsel %vm285, %v1918, 0
    %v1938 = vsel %vm285, %v1935, 0
    %1940 = vmatprep.subr.mxu0 0.0
    %1941 = vmatpush1.msra.mxu0 %v1879
    %1942 = vmatprep.subr.mxu0 0.0
    %1943 = vmatpush1.msra.mxu0 %v1880
    %1944 = vmatprep.subr.mxu0 0.0
    %1945 = vmatpush1.msra.mxu0 %v1881
    %1946 = vmatprep.subr.mxu0 0.0
    %1947 = vmatpush1.msra.mxu0 %v1882
    %1948 = vmatprep.subr.mxu0 0.0
    %1949 = vmatpush1.msra.mxu0 %v1883
    %1950 = vmatprep.subr.mxu0 0.0
    %1951 = vmatpush1.msra.mxu0 %v1884
    %1952 = vmatprep.subr.mxu0 0.0
    %1953 = vmatpush1.msra.mxu0 %v1885
    %1954 = vmatprep.subr.mxu0 0.0
    %1955 = vmatpush1.msra.mxu0 %v1886
    %1956 = vmatprep.subr.mxu0 0.0
    %1957 = vmatpush1.msra.mxu0 0.0
    %1958 = vmatprep.subr.mxu0 0.0
    %1959 = vmatpush1.msra.mxu0 0.0
    %1960 = vmatprep.subr.mxu0 0.0
    %1961 = vmatpush1.msra.mxu0 0.0
    %1962 = vmatprep.subr.mxu0 0.0
    %1963 = vmatpush1.msra.mxu0 0.0
    %1964 = vmatprep.subr.mxu0 0.0
    %1965 = vmatpush1.msra.mxu0 0.0
    %1966 = vmatprep.subr.mxu0 0.0
    %1967 = vmatpush1.msra.mxu0 0.0
    %1968 = vmatprep.subr.mxu0 0.0
    %1969 = vmatpush1.msra.mxu0 0.0
    %1970 = vmatprep.subr.mxu0 0.0
    %1971 = vmatpush1.msra.mxu0 0.0
    %1972 = vmatprep.subr.mxu0 0.0
    %1973 = vmatpush1.msra.mxu0 0.0
    %1974 = vmatprep.subr.mxu0 0.0
    %1975 = vmatpush1.msra.mxu0 0.0
    %1976 = vmatprep.subr.mxu0 0.0
    %1977 = vmatpush1.msra.mxu0 0.0
    %1978 = vmatprep.subr.mxu0 0.0
    %1979 = vmatpush1.msra.mxu0 0.0
    %1980 = vmatprep.subr.mxu0 0.0
    %1981 = vmatpush1.msra.mxu0 0.0
    %1982 = vmatprep.subr.mxu0 0.0
    %1983 = vmatpush1.msra.mxu0 0.0
    %1984 = vmatprep.subr.mxu0 0.0
    %1985 = vmatpush1.msra.mxu0 0.0
    %1986 = vmatprep.subr.mxu0 0.0
    %1987 = vmatpush1.msra.mxu0 0.0
    %1988 = vmatprep.subr.mxu0 0.0
    %1989 = vmatpush1.msra.mxu0 0.0
    %1990 = vmatprep.subr.mxu0 0.0
    %1991 = vmatpush1.msra.mxu0 0.0
    %1992 = vmatprep.subr.mxu0 0.0
    %1993 = vmatpush1.msra.mxu0 0.0
    %1994 = vmatprep.subr.mxu0 0.0
    %1995 = vmatpush1.msra.mxu0 0.0
    %1996 = vmatprep.subr.mxu0 0.0
    %1997 = vmatpush1.msra.mxu0 0.0
    %1998 = vmatprep.subr.mxu0 0.0
    %1999 = vmatpush1.msra.mxu0 0.0
    %2000 = vmatprep.subr.mxu0 0.0
    %2001 = vmatpush1.msra.mxu0 0.0
    %2002 = vmatprep.subr.mxu0 0.0
    %2003 = vmatpush1.msra.mxu0 0.0
    %2004 = vmatprep.mubr.f32.mxu0 0.0
    %2005 = vmatmul.mubr.f32.gmra.mrb[0].mxu0 %v1936
    %v2006 = vpop.f32.mrb[0].mxu0
    %v2007 = vadd.f32 %v1892, %v2006
    %v2008 = vpop.f32.mrb[0].mxu0
    %2009 = vmatprep.mubr.f32.mxu0 0.0
    %2010 = vmatmul.mubr.f32.gmra.mrb[0].mxu0 %v1938
    %v2011 = vpop.f32.mrb[0].mxu0
    %v2012 = vadd.f32 %v1892, %v2011
    %v2013 = vpop.f32.mrb[0].mxu0
    %2014 = vdwg.mxu0
    %v2015 = vtanh.pop %v2007
    %v2016 = vtanh.pop %v2012
    %v2019 = vcombine.high %v2015, %v2015
    %v2021 = vunpack.c.l.s4 1983009808
    %v2022 = vunpack.c.0.s8 %v2021
    %v2023 = vlaneseq
    %v2024 = vshrl.u32 %v2023, 7
    %v2025 = vsub.s32 %v2022, %v2024
    %v2026 = vrot.slane %v2015, %v2025
    %v2028 = vunpack.c.l.s4 1983009808
    %v2029 = vunpack.c.0.s8 %v2028
    %v2030 = vlaneseq
    %v2031 = vshrl.u32 %v2030, 7
    %v2032 = vsub.s32 %v2029, %v2031
    %v2033 = vrot.slane %v2019, %v2032
    %v2034 = vcombine.high %v2026, %v2026
    %v2035 = vcombine.high %v2033, %v2033
    %v2036 = vcombine.high %v2016, %v2016
    %v2038 = vunpack.c.l.s4 1983009808
    %v2039 = vunpack.c.0.s8 %v2038
    %v2040 = vlaneseq
    %v2041 = vshrl.u32 %v2040, 7
    %v2042 = vsub.s32 %v2039, %v2041
    %v2043 = vrot.slane %v2016, %v2042
    %v2045 = vunpack.c.l.s4 1983009808
    %v2046 = vunpack.c.0.s8 %v2045
    %v2047 = vlaneseq
    %v2048 = vshrl.u32 %v2047, 7
    %v2049 = vsub.s32 %v2046, %v2048
    %v2050 = vrot.slane %v2036, %v2049
    %v2051 = vcombine.high %v2043, %v2043
    %v2052 = vcombine.high %v2050, %v2050
    %2061 = vst.msk [vmem:[#allocation5] sm:$0x3] %vm450, %v2026
    %2062 = vst.msk [vmem:[#allocation5 + $0x2] sm:$0x3] %vm450, %v2034
    %2063 = vst.msk [vmem:[#allocation5 + $0x4] sm:$0x3] %vm450, %v2033
    %2064 = vst.msk [vmem:[#allocation5 + $0x6] sm:$0x3] %vm450, %v2035
    %2065 = vst.msk [vmem:[#allocation5 + $0x8] sm:$0x3] %vm450, %v2043
    %2066 = vst.msk [vmem:[#allocation5 + $0xa] sm:$0x3] %vm450, %v2051
    %2067 = vst.msk [vmem:[#allocation5 + $0xc] sm:$0x3] %vm450, %v2050
    %2068 = vst.msk [vmem:[#allocation5 + $0xe] sm:$0x3] %vm450, %v2052
    // Predicated region
    $region34: #{encoder_forward.1} parent=1 // pred_check
      _
    $region35: #{encoder_forward.1} parent=1 // pred_check_branch
      %2070 = sbr.rel (0) target = $region37
    $region36: #{encoder_forward.1} parent=1 // pred_region
      %s2072 = ssub.s32 256, 256
      %2073 = vsyncadd [#allocation6], %s2072
      %s2074 = sshll.u32 [#allocation5], 4
      %s2075 = int_to_ptr.vmem [resolvable:$true] %s2074
      %2080 = dma.vmem_to_hbm [thread:$0]  %s2075, 256, %s8, [#allocation6], 32, 32, 2
    $region37: #{encoder_forward.1} parent=1 // pred_fallthru
      _
    // Predicated region
    $region38: #{encoder_forward.1} parent=1 // pred_check
      _
    $region39: #{encoder_forward.1} parent=1 // pred_check_branch
      %2082 = sbr.rel (0) target = $region41
    $region40: #{encoder_forward.1} parent=1 // pred_region
      %s2084 = ssub.s32 64, 64
      %2085 = vsyncadd [#allocation8], %s2084
      %s2086 = sshll.u32 [#allocation7], 4
      %s2087 = int_to_ptr.vmem [resolvable:$true] %s2086
      %2092 = dma.vmem_to_hbm [thread:$0]  %s2087, 64, %s9, [#allocation8], 32, 32, 2
    $region41: #{encoder_forward.1} parent=1 // pred_fallthru
      _
    // Predicated region
    $region42: #{encoder_forward.1} parent=1 // pred_check
      _
    $region43: #{encoder_forward.1} parent=1 // pred_check_branch
      %2094 = sbr.rel (0) target = $region45
    $region44: #{encoder_forward.1} parent=1 // pred_region
      %2095 = dma.done [#allocation6], 256
    $region45: #{encoder_forward.1} parent=1 // pred_fallthru
      _
    // Predicated region
    $region46: #{encoder_forward.1} parent=1 // pred_check
      _
    $region47: #{encoder_forward.1} parent=1 // pred_check_branch
      %2097 = sbr.rel (0) target = $region49
    $region48: #{encoder_forward.1} parent=1 // pred_region
      %2098 = dma.done [#allocation8], 64
    $region49: #{encoder_forward.1} parent=1 // pred_fallthru
      _
    %2099 = vsyncpa [#allocation6], 1
    %2100 = vsyncpa [#allocation8], 1

</llo_original>
